<compile_context>
chip_gen: v7x
topology: tpu7x:2x2x1
jax: 0.10.0
libtpu: 0.0.40
codegen_flags: <defaults>
</compile_context>

<pallas_src>
import functools

import jax
import jax.numpy as jnp
from jax.experimental import pallas as pl
from jax.experimental.pallas import tpu as pltpu


# ----------------------------- model config ---------------------------------
VOCAB = 256      # synthetic vocab (real KoGPT2: 51200)
D     = 32       # hidden size    (real: 768)
H     = 2        # heads          (real: 12)
HD    = D // H   # head dim
LAYERS = 2       # blocks         (real: 12)
FFN   = 4 * D
MAXPOS = 64
NEG_INF = -1e9
LN_EPS = 1e-5
VMEM_LIMIT = 32 * 1024 * 1024   # conservative: fits v7x (64 MiB) as well as v5e/v6e


def _row_tile(n, cap=256):
    for t in (cap, 128, 64, 32, 16, 8):
        if t <= n and n % t == 0:
            return t
    return n


def _col_tile(v, cap=2048):
    for t in (cap, 1024, 512, 256, 128):
        if t <= v and v % t == 0:
            return t
    return v


# ------------------------------ in-kernel helpers ----------------------------
def _layernorm(x, g, b):
    mu = jnp.mean(x, axis=-1, keepdims=True)
    var = jnp.mean((x - mu) * (x - mu), axis=-1, keepdims=True)
    return (x - mu) * jax.lax.rsqrt(var + LN_EPS) * g + b


# ------------------------------ Pallas kernels -------------------------------
def _attn_block_kernel(h_ref, pad_ref, g_ref, b_ref, wqkv_ref, bqkv_ref,
                       wproj_ref, bproj_ref, o_ref, *, heads, head_dim, scale):
    """Fused: ln1 -> QKV -> per-head causal softmax attention -> out-proj -> +h.

    Processes one full batch element per grid step; output is a lane-dense
    [S, D] slab written in place over h.
    """
    h = h_ref[...].astype(jnp.float32)                     # (S, D)
    S, Dm = h.shape

    xn = _layernorm(h, g_ref[...], b_ref[...])
    qkv = jnp.dot(xn.astype(jnp.bfloat16), wqkv_ref[...],
                  preferred_element_type=jnp.float32) + bqkv_ref[...]   # (S, 3D)

    # Causal + key-padding additive mask built on the fly (free VPU work).
    rows = jax.lax.broadcasted_iota(jnp.int32, (S, S), 0)
    cols = jax.lax.broadcasted_iota(jnp.int32, (S, S), 1)
    pad = pad_ref[0]                                       # (1, S)
    add_mask = jnp.where(rows >= cols, 0.0, NEG_INF) + (1.0 - pad) * NEG_INF

    outs = []
    for hh in range(heads):                                # static unroll
        lo = hh * head_dim
        q = qkv[:, lo:lo + head_dim]
        k = qkv[:, Dm + lo:Dm + lo + head_dim]
        v = qkv[:, 2 * Dm + lo:2 * Dm + lo + head_dim]
        s = jnp.dot(q.astype(jnp.bfloat16), k.astype(jnp.bfloat16).T,
                    preferred_element_type=jnp.float32) * scale + add_mask
        s = s - jnp.max(s, axis=-1, keepdims=True)
        p = jnp.exp(s)
        p = p * pl.reciprocal(jnp.sum(p, axis=-1, keepdims=True), approx=True)
        outs.append(jnp.dot(p.astype(jnp.bfloat16), v.astype(jnp.bfloat16),
                            preferred_element_type=jnp.float32))
    a = jnp.concatenate(outs, axis=-1)                     # (S, D) lane-dense

    proj = jnp.dot(a.astype(jnp.bfloat16), wproj_ref[...],
                   preferred_element_type=jnp.float32) + bproj_ref[...]
    o_ref[...] = (h + proj).astype(o_ref.dtype)            # fused residual


def _mlp_block_kernel(h_ref, g_ref, b_ref, wfc_ref, bfc_ref,
                      wout_ref, bout_ref, o_ref):
    """Fused: ln2 -> fc -> gelu_new -> out-proj -> +h on a [TM, D] row slab."""
    h = h_ref[...].astype(jnp.float32)
    xn = _layernorm(h, g_ref[...], b_ref[...])
    y = jnp.dot(xn.astype(jnp.bfloat16), wfc_ref[...],
                preferred_element_type=jnp.float32) + bfc_ref[...]
    # GPT-2 "gelu_new" (tanh approximation), kept fp32 (v5e has no bf16 VPU/EUP).
    y = 0.5 * y * (1.0 + jnp.tanh(0.7978845608028654 * (y + 0.044715 * (y * y * y))))
    z = jnp.dot(y.astype(jnp.bfloat16), wout_ref[...],
                preferred_element_type=jnp.float32) + bout_ref[...]
    o_ref[...] = (h + z).astype(o_ref.dtype)               # fused residual


def _lmhead_kernel(h_ref, g_ref, b_ref, w_ref, o_ref):
    """Fused: ln_f -> tied LM head on a (row tile, vocab tile) output block."""
    h = h_ref[...].astype(jnp.float32)
    xn = _layernorm(h, g_ref[...], b_ref[...])
    o_ref[...] = jnp.dot(xn.astype(jnp.bfloat16), w_ref[...],
                         preferred_element_type=jnp.float32).astype(o_ref.dtype)


# ------------------------------ kernel wrappers ------------------------------
def attn_block(h, pad_b1s, blk, batch, seq):
    """h: [B*S, D] flat token-major; pad_b1s: [B,1,S]; grid over batch."""
    N, Dm = h.shape
    full = lambda i: (0, 0)
    return pl.pallas_call(
        functools.partial(_attn_block_kernel, heads=H, head_dim=HD,
                          scale=1.0 / (HD ** 0.5)),
        out_shape=jax.ShapeDtypeStruct((N, Dm), h.dtype),
        grid=(batch,),
        in_specs=[
            pl.BlockSpec((seq, Dm), lambda i: (i, 0)),      # h rows of batch i
            pl.BlockSpec((1, 1, seq), lambda i: (i, 0, 0)), # padding row
            pl.BlockSpec((1, Dm), full),                    # ln1 gamma
            pl.BlockSpec((1, Dm), full),                    # ln1 beta
            pl.BlockSpec((Dm, 3 * Dm), full),               # w_qkv (bf16)
            pl.BlockSpec((1, 3 * Dm), full),                # b_qkv
            pl.BlockSpec((Dm, Dm), full),                   # w_proj (bf16)
            pl.BlockSpec((1, Dm), full),                    # b_proj
        ],
        out_specs=pl.BlockSpec((seq, Dm), lambda i: (i, 0)),
        input_output_aliases={0: 0},                        # update h in place
        compiler_params=pltpu.CompilerParams(
            dimension_semantics=("parallel",),
            vmem_limit_bytes=VMEM_LIMIT),
    )(h, pad_b1s, blk["ln1_g"], blk["ln1_b"],
      blk["w_qkv"], blk["b_qkv"], blk["w_proj"], blk["b_proj"])


def mlp_block(h, blk):
    N, Dm = h.shape
    tm = _row_tile(N)
    full = lambda i: (0, 0)
    return pl.pallas_call(
        _mlp_block_kernel,
        out_shape=jax.ShapeDtypeStruct((N, Dm), h.dtype),
        grid=(N // tm,),
        in_specs=[
            pl.BlockSpec((tm, Dm), lambda i: (i, 0)),
            pl.BlockSpec((1, Dm), full),                    # ln2 gamma
            pl.BlockSpec((1, Dm), full),                    # ln2 beta
            pl.BlockSpec((Dm, FFN), full),                  # w_fc (bf16)
            pl.BlockSpec((1, FFN), full),                   # b_fc
            pl.BlockSpec((FFN, Dm), full),                  # w_out (bf16)
            pl.BlockSpec((1, Dm), full),                    # b_out
        ],
        out_specs=pl.BlockSpec((tm, Dm), lambda i: (i, 0)),
        input_output_aliases={0: 0},                        # update h in place
        compiler_params=pltpu.CompilerParams(
            dimension_semantics=("parallel",),
            vmem_limit_bytes=VMEM_LIMIT),
    )(h, blk["ln2_g"], blk["ln2_b"],
      blk["w_fc"], blk["b_fc"], blk["w_out"], blk["b_out"])


def lm_head(h, params):
    N, Dm = h.shape
    V = params["wte_t"].shape[1]
    tm = _row_tile(N)
    tv = _col_tile(V)
    return pl.pallas_call(
        _lmhead_kernel,
        out_shape=jax.ShapeDtypeStruct((N, V), jnp.float32),
        grid=(N // tm, V // tv),
        in_specs=[
            pl.BlockSpec((tm, Dm), lambda i, j: (i, 0)),
            pl.BlockSpec((1, Dm), lambda i, j: (0, 0)),     # ln_f gamma
            pl.BlockSpec((1, Dm), lambda i, j: (0, 0)),     # ln_f beta
            pl.BlockSpec((Dm, tv), lambda i, j: (0, j)),    # wte.T tile (bf16)
        ],
        out_specs=pl.BlockSpec((tm, tv), lambda i, j: (i, j)),
        compiler_params=pltpu.CompilerParams(
            dimension_semantics=("parallel", "parallel"),
            vmem_limit_bytes=VMEM_LIMIT),
    )(h, params["lnf_g"], params["lnf_b"], params["wte_t"])


# ------------------------------ parameters -----------------------------------
def init_params(key):
    keys = jax.random.split(key, 4 + LAYERS)
    std = 0.02
    wte = jax.random.normal(keys[0], (VOCAB, D), jnp.float32) * std
    params = {
        "wte": wte,                                   # fp32 (embedding gather)
        "wte_t": wte.T.astype(jnp.bfloat16),          # bf16 tied LM head
        "wpe": jax.random.normal(keys[1], (MAXPOS, D), jnp.float32) * std,
        "lnf_g": jnp.ones((1, D), jnp.float32),
        "lnf_b": jnp.zeros((1, D), jnp.float32),
        "blocks": [],
    }
    for l in range(LAYERS):
        ks = jax.random.split(keys[4 + l], 4)
        params["blocks"].append({
            "ln1_g": jnp.ones((1, D), jnp.float32),
            "ln1_b": jnp.zeros((1, D), jnp.float32),
            "w_qkv": (jax.random.normal(ks[0], (D, 3 * D), jnp.float32) * std
                      ).astype(jnp.bfloat16),
            "b_qkv": jnp.zeros((1, 3 * D), jnp.float32),
            "w_proj": (jax.random.normal(ks[1], (D, D), jnp.float32) * std
                       ).astype(jnp.bfloat16),
            "b_proj": jnp.zeros((1, D), jnp.float32),
            "ln2_g": jnp.ones((1, D), jnp.float32),
            "ln2_b": jnp.zeros((1, D), jnp.float32),
            "w_fc": (jax.random.normal(ks[2], (D, FFN), jnp.float32) * std
                     ).astype(jnp.bfloat16),
            "b_fc": jnp.zeros((1, FFN), jnp.float32),
            "w_out": (jax.random.normal(ks[3], (FFN, D), jnp.float32) * std
                      ).astype(jnp.bfloat16),
            "b_out": jnp.zeros((1, D), jnp.float32),
        })
    return params


# ------------------------------ forward pass ---------------------------------
def kogpt2_chat_forward(params, input_ids, attention_mask=None):
    """Mirrors KoGPT2ChatModel.forward: returns logits [B, S, VOCAB]."""
    B, S = input_ids.shape
    if attention_mask is None:
        attention_mask = jnp.ones((B, S), jnp.float32)
    pad_b1s = attention_mask.astype(jnp.float32).reshape(B, 1, S)

    # --- embeddings (token-id gather is data-dependent; kept as JAX glue) ---
    # TODO(synk): fold the wte gather into the first fused kernel via scalar
    # prefetch + pl.Element row gather; left in plain JAX for now.
    tok = jnp.take(params["wte"], input_ids.reshape(-1), axis=0)          # [B*S, D]
    pos = jnp.take(params["wpe"], jnp.arange(S), axis=0)                   # [S, D]
    h = tok + jnp.tile(pos, (B, 1))                                        # [B*S, D]

    for blk in params["blocks"]:
        h = attn_block(h, pad_b1s, blk, B, S)   # ln1 + attn + proj + residual
        h = mlp_block(h, blk)                   # ln2 + mlp + residual

    logits = lm_head(h, params)                 # ln_f + tied LM head, tiled
    return logits.reshape(B, S, VOCAB)


# TODO(synk): `generate` (autoregressive sampling loop) is host-side control
# flow around repeated forward calls; not a kernel, left unimplemented.


if __name__ == "__main__":
    key = jax.random.PRNGKey(0)
    pkey, ikey = jax.random.split(key)
    params = init_params(pkey)

    B, S = 2, 8
    input_ids = jax.random.randint(ikey, (B, S), 0, VOCAB, dtype=jnp.int32)
    # second sequence has 3 trailing padding tokens
    attention_mask = jnp.array(
        [[1, 1, 1, 1, 1, 1, 1, 1],
         [1, 1, 1, 1, 1, 0, 0, 0]], dtype=jnp.float32)

    logits = jax.jit(kogpt2_chat_forward)(params, input_ids, attention_mask)
    jax.block_until_ready(logits)
    assert logits.shape == (B, S, VOCAB)
    assert bool(jnp.all(jnp.isfinite(logits)))
    print("KERNEL_OK")
</pallas_src>

<mosaic_0001>
module attributes {stable_mosaic.version = 11 : i64} {
  func.func @_mlp_block_kernel(%arg0: i32, %arg1: memref<16x32xf32, #tpu.memory_space<vmem>>, %arg2: memref<1x32xf32, #tpu.memory_space<vmem>>, %arg3: memref<1x32xf32, #tpu.memory_space<vmem>>, %arg4: memref<32x128xbf16, #tpu.memory_space<vmem>>, %arg5: memref<1x128xf32, #tpu.memory_space<vmem>>, %arg6: memref<128x32xbf16, #tpu.memory_space<vmem>>, %arg7: memref<1x32xf32, #tpu.memory_space<vmem>>, %arg8: memref<16x32xf32, #tpu.memory_space<vmem>>) attributes {dimension_semantics = [#tpu.dimension_semantics<parallel>], iteration_bounds = array<i64: 1>, scalar_prefetch = 0 : i64, scratch_operands = 0 : i64, tpu.core_type = #tpu.core_type<tc>, window_params = [{transform_indices = @transform_0, window_bounds = array<i64: 16, 32>}, {pipeline_mode = #tpu.pipeline_mode<synchronous>, transform_indices = @transform_1, window_bounds = array<i64: 1, 32>}, {pipeline_mode = #tpu.pipeline_mode<synchronous>, transform_indices = @transform_2, window_bounds = array<i64: 1, 32>}, {pipeline_mode = #tpu.pipeline_mode<synchronous>, transform_indices = @transform_3, window_bounds = array<i64: 32, 128>}, {pipeline_mode = #tpu.pipeline_mode<synchronous>, transform_indices = @transform_4, window_bounds = array<i64: 1, 128>}, {pipeline_mode = #tpu.pipeline_mode<synchronous>, transform_indices = @transform_5, window_bounds = array<i64: 128, 32>}, {pipeline_mode = #tpu.pipeline_mode<synchronous>, transform_indices = @transform_6, window_bounds = array<i64: 1, 32>}, {transform_indices = @transform_7, window_bounds = array<i64: 16, 32>}]} {
    %c0 = arith.constant 0 : index
    %c0_0 = arith.constant 0 : index
    %0 = vector.load %arg1[%c0, %c0_0] : memref<16x32xf32, #tpu.memory_space<vmem>>, vector<16x32xf32>
    %c0_1 = arith.constant 0 : index
    %c0_2 = arith.constant 0 : index
    %1 = vector.load %arg2[%c0_1, %c0_2] : memref<1x32xf32, #tpu.memory_space<vmem>>, vector<1x32xf32>
    %c0_3 = arith.constant 0 : index
    %c0_4 = arith.constant 0 : index
    %2 = vector.load %arg3[%c0_3, %c0_4] : memref<1x32xf32, #tpu.memory_space<vmem>>, vector<1x32xf32>
    %cst = arith.constant dense<0.000000e+00> : vector<16xf32>
    %3 = vector.multi_reduction <add>, %0, %cst [1] : vector<16x32xf32> to vector<16xf32>
    %4 = vector.shape_cast %3 : vector<16xf32> to vector<16x1xf32>
    %cst_5 = arith.constant 3.200000e+01 : f32
    %5 = vector.broadcast %cst_5 : f32 to vector<16x1xf32>
    %6 = arith.divf %4, %5 : vector<16x1xf32>
    %7 = vector.broadcast %6 : vector<16x1xf32> to vector<16x32xf32>
    %8 = arith.subf %0, %7 : vector<16x32xf32>
    %9 = vector.broadcast %6 : vector<16x1xf32> to vector<16x32xf32>
    %10 = arith.subf %0, %9 : vector<16x32xf32>
    %11 = arith.mulf %8, %10 : vector<16x32xf32>
    %cst_6 = arith.constant dense<0.000000e+00> : vector<16xf32>
    %12 = vector.multi_reduction <add>, %11, %cst_6 [1] : vector<16x32xf32> to vector<16xf32>
    %13 = vector.shape_cast %12 : vector<16xf32> to vector<16x1xf32>
    %cst_7 = arith.constant 3.200000e+01 : f32
    %14 = vector.broadcast %cst_7 : f32 to vector<16x1xf32>
    %15 = arith.divf %13, %14 : vector<16x1xf32>
    %16 = vector.broadcast %6 : vector<16x1xf32> to vector<16x32xf32>
    %17 = arith.subf %0, %16 : vector<16x32xf32>
    %cst_8 = arith.constant 9.99999974E-6 : f32
    %18 = vector.broadcast %cst_8 : f32 to vector<16x1xf32>
    %19 = arith.addf %15, %18 : vector<16x1xf32>
    %20 = math.rsqrt %19 : vector<16x1xf32>
    %21 = vector.broadcast %20 : vector<16x1xf32> to vector<16x32xf32>
    %22 = arith.mulf %17, %21 : vector<16x32xf32>
    %23 = vector.broadcast %1 : vector<1x32xf32> to vector<16x32xf32>
    %24 = arith.mulf %22, %23 : vector<16x32xf32>
    %25 = vector.broadcast %2 : vector<1x32xf32> to vector<16x32xf32>
    %26 = arith.addf %24, %25 : vector<16x32xf32>
    %27 = arith.truncf %26 : vector<16x32xf32> to vector<16x32xbf16>
    %c0_9 = arith.constant 0 : index
    %c0_10 = arith.constant 0 : index
    %28 = vector.load %arg4[%c0_9, %c0_10] : memref<32x128xbf16, #tpu.memory_space<vmem>>, vector<32x128xbf16>
    %cst_11 = arith.constant dense<0.000000e+00> : vector<16x128xf32>
    %29 = tpu.matmul %27, %28, %cst_11 {dimension_numbers = #tpu.dot_dimension_numbers<[1], [0], [0], [1], [0, 0, 1, 1], [], []>} : vector<16x32xbf16>, vector<32x128xbf16>, vector<16x128xf32> -> vector<16x128xf32>
    %c0_12 = arith.constant 0 : index
    %c0_13 = arith.constant 0 : index
    %30 = vector.load %arg5[%c0_12, %c0_13] : memref<1x128xf32, #tpu.memory_space<vmem>>, vector<1x128xf32>
    %31 = vector.broadcast %30 : vector<1x128xf32> to vector<16x128xf32>
    %32 = arith.addf %29, %31 : vector<16x128xf32>
    %cst_14 = arith.constant 5.000000e-01 : f32
    %33 = vector.broadcast %cst_14 : f32 to vector<16x128xf32>
    %34 = arith.mulf %33, %32 : vector<16x128xf32>
    %35 = arith.mulf %32, %32 : vector<16x128xf32>
    %36 = arith.mulf %35, %32 : vector<16x128xf32>
    %cst_15 = arith.constant 4.471500e-02 : f32
    %37 = vector.broadcast %cst_15 : f32 to vector<16x128xf32>
    %38 = arith.mulf %37, %36 : vector<16x128xf32>
    %39 = arith.addf %32, %38 : vector<16x128xf32>
    %cst_16 = arith.constant 0.797884583 : f32
    %40 = vector.broadcast %cst_16 : f32 to vector<16x128xf32>
    %41 = arith.mulf %40, %39 : vector<16x128xf32>
    %42 = math.tanh %41 : vector<16x128xf32>
    %cst_17 = arith.constant 1.000000e+00 : f32
    %43 = vector.broadcast %cst_17 : f32 to vector<16x128xf32>
    %44 = arith.addf %43, %42 : vector<16x128xf32>
    %45 = arith.mulf %34, %44 : vector<16x128xf32>
    %46 = arith.truncf %45 : vector<16x128xf32> to vector<16x128xbf16>
    %c0_18 = arith.constant 0 : index
    %c0_19 = arith.constant 0 : index
    %47 = vector.load %arg6[%c0_18, %c0_19] : memref<128x32xbf16, #tpu.memory_space<vmem>>, vector<128x32xbf16>
    %cst_20 = arith.constant dense<0.000000e+00> : vector<16x32xf32>
    %48 = tpu.matmul %46, %47, %cst_20 {dimension_numbers = #tpu.dot_dimension_numbers<[1], [0], [0], [1], [0, 0, 1, 1], [], []>} : vector<16x128xbf16>, vector<128x32xbf16>, vector<16x32xf32> -> vector<16x32xf32>
    %c0_21 = arith.constant 0 : index
    %c0_22 = arith.constant 0 : index
    %49 = vector.load %arg7[%c0_21, %c0_22] : memref<1x32xf32, #tpu.memory_space<vmem>>, vector<1x32xf32>
    %50 = vector.broadcast %49 : vector<1x32xf32> to vector<16x32xf32>
    %51 = arith.addf %48, %50 : vector<16x32xf32>
    %52 = arith.addf %0, %51 : vector<16x32xf32>
    %c0_23 = arith.constant 0 : index
    %c0_24 = arith.constant 0 : index
    %53 = vector.load %arg8[%c0_23, %c0_24] : memref<16x32xf32, #tpu.memory_space<vmem>>, vector<16x32xf32>
    tpu.vector_store %arg8[%c0_23, %c0_24], %52 {strides = array<i32>} : memref<16x32xf32, #tpu.memory_space<vmem>>, vector<16x32xf32>,
    return
  }
  func.func @transform_0(%arg0: i32) -> (i32, i32) {
    %c0_i32 = arith.constant 0 : i32
    %c0_i32_0 = arith.constant 0 : i32
    return %arg0, %c0_i32 : i32, i32
  }
  func.func @transform_1(%arg0: i32) -> (i32, i32) {
    %c0_i32 = arith.constant 0 : i32
    %c0_i32_0 = arith.constant 0 : i32
    %c0_i32_1 = arith.constant 0 : i32
    return %c0_i32, %c0_i32_0 : i32, i32
  }
  func.func @transform_2(%arg0: i32) -> (i32, i32) {
    %c0_i32 = arith.constant 0 : i32
    %c0_i32_0 = arith.constant 0 : i32
    %c0_i32_1 = arith.constant 0 : i32
    return %c0_i32, %c0_i32_0 : i32, i32
  }
  func.func @transform_3(%arg0: i32) -> (i32, i32) {
    %c0_i32 = arith.constant 0 : i32
    %c0_i32_0 = arith.constant 0 : i32
    %c0_i32_1 = arith.constant 0 : i32
    return %c0_i32, %c0_i32_0 : i32, i32
  }
  func.func @transform_4(%arg0: i32) -> (i32, i32) {
    %c0_i32 = arith.constant 0 : i32
    %c0_i32_0 = arith.constant 0 : i32
    %c0_i32_1 = arith.constant 0 : i32
    return %c0_i32, %c0_i32_0 : i32, i32
  }
  func.func @transform_5(%arg0: i32) -> (i32, i32) {
    %c0_i32 = arith.constant 0 : i32
    %c0_i32_0 = arith.constant 0 : i32
    %c0_i32_1 = arith.constant 0 : i32
    return %c0_i32, %c0_i32_0 : i32, i32
  }
  func.func @transform_6(%arg0: i32) -> (i32, i32) {
    %c0_i32 = arith.constant 0 : i32
    %c0_i32_0 = arith.constant 0 : i32
    %c0_i32_1 = arith.constant 0 : i32
    return %c0_i32, %c0_i32_0 : i32, i32
  }
  func.func @transform_7(%arg0: i32) -> (i32, i32) {
    %c0_i32 = arith.constant 0 : i32
    %c0_i32_0 = arith.constant 0 : i32
    return %arg0, %c0_i32 : i32, i32
  }
}

module attributes {stable_mosaic.version = 11 : i64} {
  func.func @_lmhead_kernel(%arg0: i32, %arg1: i32, %arg2: memref<16x32xf32, #tpu.memory_space<vmem>>, %arg3: memref<1x32xf32, #tpu.memory_space<vmem>>, %arg4: memref<1x32xf32, #tpu.memory_space<vmem>>, %arg5: memref<32x256xbf16, #tpu.memory_space<vmem>>, %arg6: memref<16x256xf32, #tpu.memory_space<vmem>>) attributes {dimension_semantics = [#tpu.dimension_semantics<parallel>, #tpu.dimension_semantics<parallel>], iteration_bounds = array<i64: 1, 1>, scalar_prefetch = 0 : i64, scratch_operands = 0 : i64, tpu.core_type = #tpu.core_type<tc>, window_params = [{transform_indices = @transform_0, window_bounds = array<i64: 16, 32>}, {pipeline_mode = #tpu.pipeline_mode<synchronous>, transform_indices = @transform_1, window_bounds = array<i64: 1, 32>}, {pipeline_mode = #tpu.pipeline_mode<synchronous>, transform_indices = @transform_2, window_bounds = array<i64: 1, 32>}, {transform_indices = @transform_3, window_bounds = array<i64: 32, 256>}, {transform_indices = @transform_4, window_bounds = array<i64: 16, 256>}]} {
    %c0 = arith.constant 0 : index
    %c0_0 = arith.constant 0 : index
    %0 = vector.load %arg2[%c0, %c0_0] : memref<16x32xf32, #tpu.memory_space<vmem>>, vector<16x32xf32>
    %c0_1 = arith.constant 0 : index
    %c0_2 = arith.constant 0 : index
    %1 = vector.load %arg3[%c0_1, %c0_2] : memref<1x32xf32, #tpu.memory_space<vmem>>, vector<1x32xf32>
    %c0_3 = arith.constant 0 : index
    %c0_4 = arith.constant 0 : index
    %2 = vector.load %arg4[%c0_3, %c0_4] : memref<1x32xf32, #tpu.memory_space<vmem>>, vector<1x32xf32>
    %cst = arith.constant dense<0.000000e+00> : vector<16xf32>
    %3 = vector.multi_reduction <add>, %0, %cst [1] : vector<16x32xf32> to vector<16xf32>
    %4 = vector.shape_cast %3 : vector<16xf32> to vector<16x1xf32>
    %cst_5 = arith.constant 3.200000e+01 : f32
    %5 = vector.broadcast %cst_5 : f32 to vector<16x1xf32>
    %6 = arith.divf %4, %5 : vector<16x1xf32>
    %7 = vector.broadcast %6 : vector<16x1xf32> to vector<16x32xf32>
    %8 = arith.subf %0, %7 : vector<16x32xf32>
    %9 = vector.broadcast %6 : vector<16x1xf32> to vector<16x32xf32>
    %10 = arith.subf %0, %9 : vector<16x32xf32>
    %11 = arith.mulf %8, %10 : vector<16x32xf32>
    %cst_6 = arith.constant dense<0.000000e+00> : vector<16xf32>
    %12 = vector.multi_reduction <add>, %11, %cst_6 [1] : vector<16x32xf32> to vector<16xf32>
    %13 = vector.shape_cast %12 : vector<16xf32> to vector<16x1xf32>
    %cst_7 = arith.constant 3.200000e+01 : f32
    %14 = vector.broadcast %cst_7 : f32 to vector<16x1xf32>
    %15 = arith.divf %13, %14 : vector<16x1xf32>
    %16 = vector.broadcast %6 : vector<16x1xf32> to vector<16x32xf32>
    %17 = arith.subf %0, %16 : vector<16x32xf32>
    %cst_8 = arith.constant 9.99999974E-6 : f32
    %18 = vector.broadcast %cst_8 : f32 to vector<16x1xf32>
    %19 = arith.addf %15, %18 : vector<16x1xf32>
    %20 = math.rsqrt %19 : vector<16x1xf32>
    %21 = vector.broadcast %20 : vector<16x1xf32> to vector<16x32xf32>
    %22 = arith.mulf %17, %21 : vector<16x32xf32>
    %23 = vector.broadcast %1 : vector<1x32xf32> to vector<16x32xf32>
    %24 = arith.mulf %22, %23 : vector<16x32xf32>
    %25 = vector.broadcast %2 : vector<1x32xf32> to vector<16x32xf32>
    %26 = arith.addf %24, %25 : vector<16x32xf32>
    %27 = arith.truncf %26 : vector<16x32xf32> to vector<16x32xbf16>
    %c0_9 = arith.constant 0 : index
    %c0_10 = arith.constant 0 : index
    %28 = vector.load %arg5[%c0_9, %c0_10] : memref<32x256xbf16, #tpu.memory_space<vmem>>, vector<32x256xbf16>
    %cst_11 = arith.constant dense<0.000000e+00> : vector<16x256xf32>
    %29 = tpu.matmul %27, %28, %cst_11 {dimension_numbers = #tpu.dot_dimension_numbers<[1], [0], [0], [1], [0, 0, 1, 1], [], []>} : vector<16x32xbf16>, vector<32x256xbf16>, vector<16x256xf32> -> vector<16x256xf32>
    %c0_12 = arith.constant 0 : index
    %c0_13 = arith.constant 0 : index
    %30 = vector.load %arg6[%c0_12, %c0_13] : memref<16x256xf32, #tpu.memory_space<vmem>>, vector<16x256xf32>
    tpu.vector_store %arg6[%c0_12, %c0_13], %29 {strides = array<i32>} : memref<16x256xf32, #tpu.memory_space<vmem>>, vector<16x256xf32>,
    return
  }
  func.func @transform_0(%arg0: i32, %arg1: i32) -> (i32, i32) {
    %c0_i32 = arith.constant 0 : i32
    %c0_i32_0 = arith.constant 0 : i32
    return %arg0, %c0_i32 : i32, i32
  }
  func.func @transform_1(%arg0: i32, %arg1: i32) -> (i32, i32) {
    %c0_i32 = arith.constant 0 : i32
    %c0_i32_0 = arith.constant 0 : i32
    %c0_i32_1 = arith.constant 0 : i32
    return %c0_i32, %c0_i32_0 : i32, i32
  }
  func.func @transform_2(%arg0: i32, %arg1: i32) -> (i32, i32) {
    %c0_i32 = arith.constant 0 : i32
    %c0_i32_0 = arith.constant 0 : i32
    %c0_i32_1 = arith.constant 0 : i32
    return %c0_i32, %c0_i32_0 : i32, i32
  }
  func.func @transform_3(%arg0: i32, %arg1: i32) -> (i32, i32) {
    %c0_i32 = arith.constant 0 : i32
    %c0_i32_0 = arith.constant 0 : i32
    return %c0_i32, %arg1 : i32, i32
  }
  func.func @transform_4(%arg0: i32, %arg1: i32) -> (i32, i32) {
    %c0_i32 = arith.constant 0 : i32
    return %arg0, %arg1 : i32, i32
  }
}

module attributes {stable_mosaic.version = 11 : i64} {
  func.func @_attn_block_kernel(%arg0: i32, %arg1: memref<8x32xf32, #tpu.memory_space<vmem>>, %arg2: memref<1x1x8xf32, #tpu.memory_space<vmem>>, %arg3: memref<1x32xf32, #tpu.memory_space<vmem>>, %arg4: memref<1x32xf32, #tpu.memory_space<vmem>>, %arg5: memref<32x96xbf16, #tpu.memory_space<vmem>>, %arg6: memref<1x96xf32, #tpu.memory_space<vmem>>, %arg7: memref<32x32xbf16, #tpu.memory_space<vmem>>, %arg8: memref<1x32xf32, #tpu.memory_space<vmem>>, %arg9: memref<8x32xf32, #tpu.memory_space<vmem>>) attributes {dimension_semantics = [#tpu.dimension_semantics<parallel>], iteration_bounds = array<i64: 2>, scalar_prefetch = 0 : i64, scratch_operands = 0 : i64, tpu.core_type = #tpu.core_type<tc>, window_params = [{transform_indices = @transform_0, window_bounds = array<i64: 8, 32>}, {transform_indices = @transform_1, window_bounds = array<i64: 1, 1, 8>}, {pipeline_mode = #tpu.pipeline_mode<synchronous>, transform_indices = @transform_2, window_bounds = array<i64: 1, 32>}, {pipeline_mode = #tpu.pipeline_mode<synchronous>, transform_indices = @transform_3, window_bounds = array<i64: 1, 32>}, {pipeline_mode = #tpu.pipeline_mode<synchronous>, transform_indices = @transform_4, window_bounds = array<i64: 32, 96>}, {pipeline_mode = #tpu.pipeline_mode<synchronous>, transform_indices = @transform_5, window_bounds = array<i64: 1, 96>}, {pipeline_mode = #tpu.pipeline_mode<synchronous>, transform_indices = @transform_6, window_bounds = array<i64: 32, 32>}, {pipeline_mode = #tpu.pipeline_mode<synchronous>, transform_indices = @transform_7, window_bounds = array<i64: 1, 32>}, {transform_indices = @transform_8, window_bounds = array<i64: 8, 32>}]} {
    %c0 = arith.constant 0 : index
    %c0_0 = arith.constant 0 : index
    %0 = vector.load %arg1[%c0, %c0_0] : memref<8x32xf32, #tpu.memory_space<vmem>>, vector<8x32xf32>
    %c0_1 = arith.constant 0 : index
    %c0_2 = arith.constant 0 : index
    %1 = vector.load %arg3[%c0_1, %c0_2] : memref<1x32xf32, #tpu.memory_space<vmem>>, vector<1x32xf32>
    %c0_3 = arith.constant 0 : index
    %c0_4 = arith.constant 0 : index
    %2 = vector.load %arg4[%c0_3, %c0_4] : memref<1x32xf32, #tpu.memory_space<vmem>>, vector<1x32xf32>
    %cst = arith.constant dense<0.000000e+00> : vector<8xf32>
    %3 = vector.multi_reduction <add>, %0, %cst [1] : vector<8x32xf32> to vector<8xf32>
    %4 = vector.shape_cast %3 : vector<8xf32> to vector<8x1xf32>
    %cst_5 = arith.constant 3.200000e+01 : f32
    %5 = vector.broadcast %cst_5 : f32 to vector<8x1xf32>
    %6 = arith.divf %4, %5 : vector<8x1xf32>
    %7 = vector.broadcast %6 : vector<8x1xf32> to vector<8x32xf32>
    %8 = arith.subf %0, %7 : vector<8x32xf32>
    %9 = vector.broadcast %6 : vector<8x1xf32> to vector<8x32xf32>
    %10 = arith.subf %0, %9 : vector<8x32xf32>
    %11 = arith.mulf %8, %10 : vector<8x32xf32>
    %cst_6 = arith.constant dense<0.000000e+00> : vector<8xf32>
    %12 = vector.multi_reduction <add>, %11, %cst_6 [1] : vector<8x32xf32> to vector<8xf32>
    %13 = vector.shape_cast %12 : vector<8xf32> to vector<8x1xf32>
    %cst_7 = arith.constant 3.200000e+01 : f32
    %14 = vector.broadcast %cst_7 : f32 to vector<8x1xf32>
    %15 = arith.divf %13, %14 : vector<8x1xf32>
    %16 = vector.broadcast %6 : vector<8x1xf32> to vector<8x32xf32>
    %17 = arith.subf %0, %16 : vector<8x32xf32>
    %cst_8 = arith.constant 9.99999974E-6 : f32
    %18 = vector.broadcast %cst_8 : f32 to vector<8x1xf32>
    %19 = arith.addf %15, %18 : vector<8x1xf32>
    %20 = math.rsqrt %19 : vector<8x1xf32>
    %21 = vector.broadcast %20 : vector<8x1xf32> to vector<8x32xf32>
    %22 = arith.mulf %17, %21 : vector<8x32xf32>
    %23 = vector.broadcast %1 : vector<1x32xf32> to vector<8x32xf32>
    %24 = arith.mulf %22, %23 : vector<8x32xf32>
    %25 = vector.broadcast %2 : vector<1x32xf32> to vector<8x32xf32>
    %26 = arith.addf %24, %25 : vector<8x32xf32>
    %27 = arith.truncf %26 : vector<8x32xf32> to vector<8x32xbf16>
    %c0_9 = arith.constant 0 : index
    %c0_10 = arith.constant 0 : index
    %28 = vector.load %arg5[%c0_9, %c0_10] : memref<32x96xbf16, #tpu.memory_space<vmem>>, vector<32x96xbf16>
    %cst_11 = arith.constant dense<0.000000e+00> : vector<8x96xf32>
    %29 = tpu.matmul %27, %28, %cst_11 {dimension_numbers = #tpu.dot_dimension_numbers<[1], [0], [0], [1], [0, 0, 1, 1], [], []>} : vector<8x32xbf16>, vector<32x96xbf16>, vector<8x96xf32> -> vector<8x96xf32>
    %c0_12 = arith.constant 0 : index
    %c0_13 = arith.constant 0 : index
    %30 = vector.load %arg6[%c0_12, %c0_13] : memref<1x96xf32, #tpu.memory_space<vmem>>, vector<1x96xf32>
    %31 = vector.broadcast %30 : vector<1x96xf32> to vector<8x96xf32>
    %32 = arith.addf %29, %31 : vector<8x96xf32>
    %33 = tpu.iota {dimensions = array<i32: 0>} : vector<8x8xi32>
    %34 = tpu.iota {dimensions = array<i32: 1>} : vector<8x8xi32>
    %c0_14 = arith.constant 0 : index
    %c0_15 = arith.constant 0 : index
    %c0_16 = arith.constant 0 : index
    %35 = vector.load %arg2[%c0_14, %c0_15, %c0_16] : memref<1x1x8xf32, #tpu.memory_space<vmem>>, vector<1x1x8xf32>
    %36 = vector.shape_cast %35 : vector<1x1x8xf32> to vector<1x8xf32>
    %37 = arith.cmpi sge, %33, %34 : vector<8x8xi32>
    %cst_17 = arith.constant 0.000000e+00 : f32
    %cst_18 = arith.constant -1.000000e+09 : f32
    %38 = vector.broadcast %cst_17 : f32 to vector<8x8xf32>
    %39 = vector.broadcast %cst_18 : f32 to vector<8x8xf32>
    %40 = arith.select %37, %38, %39 : vector<8x8xi1>, vector<8x8xf32>
    %cst_19 = arith.constant 1.000000e+00 : f32
    %41 = vector.broadcast %cst_19 : f32 to vector<1x8xf32>
    %42 = arith.subf %41, %36 : vector<1x8xf32>
    %cst_20 = arith.constant -1.000000e+09 : f32
    %43 = vector.broadcast %cst_20 : f32 to vector<1x8xf32>
    %44 = arith.mulf %42, %43 : vector<1x8xf32>
    %45 = vector.broadcast %44 : vector<1x8xf32> to vector<8x8xf32>
    %46 = arith.addf %40, %45 : vector<8x8xf32>
    %47 = vector.extract_strided_slice %32 {offsets = [0, 0], sizes = [8, 16], strides = [1, 1]} : vector<8x96xf32> to vector<8x16xf32>
    %48 = vector.extract_strided_slice %32 {offsets = [0, 32], sizes = [8, 16], strides = [1, 1]} : vector<8x96xf32> to vector<8x16xf32>
    %49 = vector.extract_strided_slice %32 {offsets = [0, 64], sizes = [8, 16], strides = [1, 1]} : vector<8x96xf32> to vector<8x16xf32>
    %50 = arith.truncf %47 : vector<8x16xf32> to vector<8x16xbf16>
    %51 = arith.truncf %48 : vector<8x16xf32> to vector<8x16xbf16>
    %52 = tpu.transpose %51, [1, 0] : vector<8x16xbf16> -> vector<16x8xbf16>
    %cst_21 = arith.constant dense<0.000000e+00> : vector<8x8xf32>
    %53 = tpu.matmul %50, %52, %cst_21 {dimension_numbers = #tpu.dot_dimension_numbers<[1], [0], [0], [1], [0, 0, 1, 1], [], []>} : vector<8x16xbf16>, vector<16x8xbf16>, vector<8x8xf32> -> vector<8x8xf32>
    %cst_22 = arith.constant 2.500000e-01 : f32
    %54 = vector.broadcast %cst_22 : f32 to vector<8x8xf32>
    %55 = arith.mulf %53, %54 : vector<8x8xf32>
    %56 = arith.addf %55, %46 : vector<8x8xf32>
    %cst_23 = arith.constant dense<0xFF800000> : vector<8xf32>
    %57 = vector.multi_reduction <maximumf>, %56, %cst_23 [1] : vector<8x8xf32> to vector<8xf32>
    %58 = vector.shape_cast %57 : vector<8xf32> to vector<8x1xf32>
    %59 = vector.broadcast %58 : vector<8x1xf32> to vector<8x8xf32>
    %60 = arith.subf %56, %59 : vector<8x8xf32>
    %61 = math.exp %60 : vector<8x8xf32>
    %cst_24 = arith.constant dense<0.000000e+00> : vector<8xf32>
    %62 = vector.multi_reduction <add>, %61, %cst_24 [1] : vector<8x8xf32> to vector<8xf32>
    %63 = vector.shape_cast %62 : vector<8xf32> to vector<8x1xf32>
    %64 = tpu.reciprocal %63 {approx = true} : vector<8x1xf32> -> vector<8x1xf32>
    %65 = vector.broadcast %64 : vector<8x1xf32> to vector<8x8xf32>
    %66 = arith.mulf %61, %65 : vector<8x8xf32>
    %67 = arith.truncf %66 : vector<8x8xf32> to vector<8x8xbf16>
    %68 = arith.truncf %49 : vector<8x16xf32> to vector<8x16xbf16>
    %cst_25 = arith.constant dense<0.000000e+00> : vector<8x16xf32>
    %69 = tpu.matmul %67, %68, %cst_25 {dimension_numbers = #tpu.dot_dimension_numbers<[1], [0], [0], [1], [0, 0, 1, 1], [], []>} : vector<8x8xbf16>, vector<8x16xbf16>, vector<8x16xf32> -> vector<8x16xf32>
    %70 = vector.extract_strided_slice %32 {offsets = [0, 16], sizes = [8, 16], strides = [1, 1]} : vector<8x96xf32> to vector<8x16xf32>
    %71 = vector.extract_strided_slice %32 {offsets = [0, 48], sizes = [8, 16], strides = [1, 1]} : vector<8x96xf32> to vector<8x16xf32>
    %72 = vector.extract_strided_slice %32 {offsets = [0, 80], sizes = [8, 16], strides = [1, 1]} : vector<8x96xf32> to vector<8x16xf32>
    %73 = arith.truncf %70 : vector<8x16xf32> to vector<8x16xbf16>
    %74 = arith.truncf %71 : vector<8x16xf32> to vector<8x16xbf16>
    %75 = tpu.transpose %74, [1, 0] : vector<8x16xbf16> -> vector<16x8xbf16>
    %cst_26 = arith.constant dense<0.000000e+00> : vector<8x8xf32>
    %76 = tpu.matmul %73, %75, %cst_26 {dimension_numbers = #tpu.dot_dimension_numbers<[1], [0], [0], [1], [0, 0, 1, 1], [], []>} : vector<8x16xbf16>, vector<16x8xbf16>, vector<8x8xf32> -> vector<8x8xf32>
    %cst_27 = arith.constant 2.500000e-01 : f32
    %77 = vector.broadcast %cst_27 : f32 to vector<8x8xf32>
    %78 = arith.mulf %76, %77 : vector<8x8xf32>
    %79 = arith.addf %78, %46 : vector<8x8xf32>
    %cst_28 = arith.constant dense<0xFF800000> : vector<8xf32>
    %80 = vector.multi_reduction <maximumf>, %79, %cst_28 [1] : vector<8x8xf32> to vector<8xf32>
    %81 = vector.shape_cast %80 : vector<8xf32> to vector<8x1xf32>
    %82 = vector.broadcast %81 : vector<8x1xf32> to vector<8x8xf32>
    %83 = arith.subf %79, %82 : vector<8x8xf32>
    %84 = math.exp %83 : vector<8x8xf32>
    %cst_29 = arith.constant dense<0.000000e+00> : vector<8xf32>
    %85 = vector.multi_reduction <add>, %84, %cst_29 [1] : vector<8x8xf32> to vector<8xf32>
    %86 = vector.shape_cast %85 : vector<8xf32> to vector<8x1xf32>
    %87 = tpu.reciprocal %86 {approx = true} : vector<8x1xf32> -> vector<8x1xf32>
    %88 = vector.broadcast %87 : vector<8x1xf32> to vector<8x8xf32>
    %89 = arith.mulf %84, %88 : vector<8x8xf32>
    %90 = arith.truncf %89 : vector<8x8xf32> to vector<8x8xbf16>
    %91 = arith.truncf %72 : vector<8x16xf32> to vector<8x16xbf16>
    %cst_30 = arith.constant dense<0.000000e+00> : vector<8x16xf32>
    %92 = tpu.matmul %90, %91, %cst_30 {dimension_numbers = #tpu.dot_dimension_numbers<[1], [0], [0], [1], [0, 0, 1, 1], [], []>} : vector<8x8xbf16>, vector<8x16xbf16>, vector<8x16xf32> -> vector<8x16xf32>
    %93 = tpu.concatenate %69, %92 in 1 : vector<8x16xf32>, vector<8x16xf32> -> vector<8x32xf32>
    %94 = arith.truncf %93 : vector<8x32xf32> to vector<8x32xbf16>
    %c0_31 = arith.constant 0 : index
    %c0_32 = arith.constant 0 : index
    %95 = vector.load %arg7[%c0_31, %c0_32] : memref<32x32xbf16, #tpu.memory_space<vmem>>, vector<32x32xbf16>
    %cst_33 = arith.constant dense<0.000000e+00> : vector<8x32xf32>
    %96 = tpu.matmul %94, %95, %cst_33 {dimension_numbers = #tpu.dot_dimension_numbers<[1], [0], [0], [1], [0, 0, 1, 1], [], []>} : vector<8x32xbf16>, vector<32x32xbf16>, vector<8x32xf32> -> vector<8x32xf32>
    %c0_34 = arith.constant 0 : index
    %c0_35 = arith.constant 0 : index
    %97 = vector.load %arg8[%c0_34, %c0_35] : memref<1x32xf32, #tpu.memory_space<vmem>>, vector<1x32xf32>
    %98 = vector.broadcast %97 : vector<1x32xf32> to vector<8x32xf32>
    %99 = arith.addf %96, %98 : vector<8x32xf32>
    %100 = arith.addf %0, %99 : vector<8x32xf32>
    %c0_36 = arith.constant 0 : index
    %c0_37 = arith.constant 0 : index
    %101 = vector.load %arg9[%c0_36, %c0_37] : memref<8x32xf32, #tpu.memory_space<vmem>>, vector<8x32xf32>
    tpu.vector_store %arg9[%c0_36, %c0_37], %100 {strides = array<i32>} : memref<8x32xf32, #tpu.memory_space<vmem>>, vector<8x32xf32>,
    return
  }
  func.func @transform_0(%arg0: i32) -> (i32, i32) {
    %c0_i32 = arith.constant 0 : i32
    %c0_i32_0 = arith.constant 0 : i32
    return %arg0, %c0_i32 : i32, i32
  }
  func.func @transform_1(%arg0: i32) -> (i32, i32, i32) {
    %c0_i32 = arith.constant 0 : i32
    %c0_i32_0 = arith.constant 0 : i32
    %c0_i32_1 = arith.constant 0 : i32
    return %arg0, %c0_i32, %c0_i32_0 : i32, i32, i32
  }
  func.func @transform_2(%arg0: i32) -> (i32, i32) {
    %c0_i32 = arith.constant 0 : i32
    %c0_i32_0 = arith.constant 0 : i32
    %c0_i32_1 = arith.constant 0 : i32
    return %c0_i32, %c0_i32_0 : i32, i32
  }
  func.func @transform_3(%arg0: i32) -> (i32, i32) {
    %c0_i32 = arith.constant 0 : i32
    %c0_i32_0 = arith.constant 0 : i32
    %c0_i32_1 = arith.constant 0 : i32
    return %c0_i32, %c0_i32_0 : i32, i32
  }
  func.func @transform_4(%arg0: i32) -> (i32, i32) {
    %c0_i32 = arith.constant 0 : i32
    %c0_i32_0 = arith.constant 0 : i32
    %c0_i32_1 = arith.constant 0 : i32
    return %c0_i32, %c0_i32_0 : i32, i32
  }
  func.func @transform_5(%arg0: i32) -> (i32, i32) {
    %c0_i32 = arith.constant 0 : i32
    %c0_i32_0 = arith.constant 0 : i32
    %c0_i32_1 = arith.constant 0 : i32
    return %c0_i32, %c0_i32_0 : i32, i32
  }
  func.func @transform_6(%arg0: i32) -> (i32, i32) {
    %c0_i32 = arith.constant 0 : i32
    %c0_i32_0 = arith.constant 0 : i32
    %c0_i32_1 = arith.constant 0 : i32
    return %c0_i32, %c0_i32_0 : i32, i32
  }
  func.func @transform_7(%arg0: i32) -> (i32, i32) {
    %c0_i32 = arith.constant 0 : i32
    %c0_i32_0 = arith.constant 0 : i32
    %c0_i32_1 = arith.constant 0 : i32
    return %c0_i32, %c0_i32_0 : i32, i32
  }
  func.func @transform_8(%arg0: i32) -> (i32, i32) {
    %c0_i32 = arith.constant 0 : i32
    %c0_i32_0 = arith.constant 0 : i32
    return %arg0, %c0_i32 : i32, i32
  }
}

</mosaic_0001>

<llo_original>
// kernel: kogpt2_chat_forward.6
$region0: #{kogpt2_chat_forward.6}
  #allocation0 [shape = 'u32[]', space=smem, size = 0x4, offset = 0x4, fixed_abs, tag = 'smem constant byte address 0x4 - core index']
  #allocation1 [shape = 'u32[144,128]{1,0:T(1,128)}', space=vmem, size = 0x12000, scoped, tag = 'internal scratch']
  %s0 = inlined_call_operand.vmem [shape: f32[16,32], index: 0, kind: input, shape index: {}, may-alias: {0,7}]
  %s1 = inlined_call_operand.vmem [shape: f32[1,32], index: 1, kind: input, shape index: {}]
  %s2 = inlined_call_operand.vmem [shape: f32[1,32], index: 2, kind: input, shape index: {}]
  %s3 = inlined_call_operand.vmem [shape: bf16[32,128], index: 3, kind: input, shape index: {}]
  %s4 = inlined_call_operand.vmem [shape: f32[1,128], index: 4, kind: input, shape index: {}]
  %s5 = inlined_call_operand.vmem [shape: bf16[128,32], index: 5, kind: input, shape index: {}]
  %s6 = inlined_call_operand.vmem [shape: f32[1,32], index: 6, kind: input, shape index: {}]
  %s7 = inlined_call_operand.vmem [shape: f32[16,32], index: 7, kind: output, shape index: {}, may-alias: {0,7}]
  %s8 = sld [smem:[#allocation0]]
  $region38: #{kogpt2_chat_forward.6} parent=0
    _
  %s10 = ssub.s32 1, %s8
  %s11 = scalar_select 0, %s10, %s8
  // Predicated region
  $region2: #{kogpt2_chat_forward.6} parent=0 // pred_check
    _
  $region3: #{kogpt2_chat_forward.6} parent=0 // pred_check_branch
    %13 = sbr.rel (0) target = $region5
  $region4: #{kogpt2_chat_forward.6} parent=0 // pred_region
    _
  $region5: #{kogpt2_chat_forward.6} parent=0 // pred_fallthru
    _
  // Predicated region
  $region6: #{kogpt2_chat_forward.6} parent=0 // pred_check
    _
  $region7: #{kogpt2_chat_forward.6} parent=0 // pred_check_branch
    %15 = sbr.rel (0) target = $region9
  $region8: #{kogpt2_chat_forward.6} parent=0 // pred_region
    _
  $region9: #{kogpt2_chat_forward.6} parent=0 // pred_fallthru
    _
  // Predicated region
  $region10: #{kogpt2_chat_forward.6} parent=0 // pred_check
    _
  $region11: #{kogpt2_chat_forward.6} parent=0 // pred_check_branch
    %17 = sbr.rel (0) target = $region13
  $region12: #{kogpt2_chat_forward.6} parent=0 // pred_region
    _
  $region13: #{kogpt2_chat_forward.6} parent=0 // pred_fallthru
    _
  // Predicated region
  $region14: #{kogpt2_chat_forward.6} parent=0 // pred_check
    _
  $region15: #{kogpt2_chat_forward.6} parent=0 // pred_check_branch
    %19 = sbr.rel (0) target = $region17
  $region16: #{kogpt2_chat_forward.6} parent=0 // pred_region
    _
  $region17: #{kogpt2_chat_forward.6} parent=0 // pred_fallthru
    _
  // Predicated region
  $region18: #{kogpt2_chat_forward.6} parent=0 // pred_check
    _
  $region19: #{kogpt2_chat_forward.6} parent=0 // pred_check_branch
    %21 = sbr.rel (0) target = $region21
  $region20: #{kogpt2_chat_forward.6} parent=0 // pred_region
    _
  $region21: #{kogpt2_chat_forward.6} parent=0 // pred_fallthru
    _
  // Predicated region
  $region22: #{kogpt2_chat_forward.6} parent=0 // pred_check
    _
  $region23: #{kogpt2_chat_forward.6} parent=0 // pred_check_branch
    %23 = sbr.rel (0) target = $region25
  $region24: #{kogpt2_chat_forward.6} parent=0 // pred_region
    _
  $region25: #{kogpt2_chat_forward.6} parent=0 // pred_fallthru
    _
  // Predicated region
  $region26: #{kogpt2_chat_forward.6} parent=0 // pred_check
    _
  $region27: #{kogpt2_chat_forward.6} parent=0 // pred_check_branch
    %25 = sbr.rel (0) target = $region29
  $region28: #{kogpt2_chat_forward.6} parent=0 // pred_region
    _
  $region29: #{kogpt2_chat_forward.6} parent=0 // pred_fallthru
    _
  %v27 = vld [vmem:[%s0] sm:$0xff]
  %v28 = vld [vmem:[%s0 + $0x8] sm:$0xff]
  %v29 = vld [vmem:[%s1] sm:$0x1]
  %v30 = vld [vmem:[%s2] sm:$0x1]
  %vm31 = vcmask 261120
  %v32 = vsel %vm31, %v27, 0.0
  %33 = vadd.xlane.f32.xlu0 %v32
  %v34 = vpop.xlane.xlu0 %33
  %v35 = vsel %vm31, %v28, 0.0
  %36 = vadd.xlane.f32.xlu0 %v35
  %v37 = vpop.xlane.xlu0 %36
  %v38 = vrcp.pop 32.0
  %v39 = vmul.f32 %v34, %v38
  %v40 = vmul.f32 %v37, %v38
  %v41 = vsub.f32 %v27, %v39
  %v42 = vsub.f32 %v28, %v40
  %v43 = vmul.f32 %v41, %v41
  %v44 = vmul.f32 %v42, %v42
  %v45 = vsel %vm31, %v43, 0.0
  %46 = vadd.xlane.f32.xlu0 %v45
  %v47 = vpop.xlane.xlu0 %46
  %v48 = vsel %vm31, %v44, 0.0
  %49 = vadd.xlane.f32.xlu0 %v48
  %v50 = vpop.xlane.xlu0 %49
  %v51 = vmul.f32 %v47, %v38
  %v52 = vmul.f32 %v50, %v38
  %v53 = vadd.f32 %v51, 1e-05
  %v54 = vadd.f32 %v52, 1e-05
  %v55 = vrsqrt.pop %v53
  %v56 = vrsqrt.pop %v54
  %v57 = vmul.f32 %v41, %v55
  %v58 = vmul.f32 %v42, %v56
  %v60 = vlaneseq
  %v61 = vshrl.u32 %v60, 7
  %v62 = vsub.s32 0, %v61
  %v63 = vrot.slane %v29, %v62
  %v65 = vmul.f32 %v57, %v63
  %v66 = vmul.f32 %v58, %v63
  %v68 = vlaneseq
  %v69 = vshrl.u32 %v68, 7
  %v70 = vsub.s32 0, %v69
  %v71 = vrot.slane %v30, %v70
  %v73 = vadd.f32 %v65, %v71
  %v74 = vadd.f32 %v66, %v71
  %v75 = vpack.c.bf16 %v74, %v73
  %v76 = vld [vmem:[%s3] sm:$0xf]
  %v77 = vld [vmem:[%s3 + $0x4] sm:$0xf]
  %v78 = vld [vmem:[%s3 + $0x8] sm:$0xf]
  %v79 = vld [vmem:[%s3 + $0xc] sm:$0xf]
  %v80 = vld [vmem:[%s4] sm:$0x1]
  %v82 = vlaneseq
  %v83 = vshrl.u32 %v82, 7
  %v84 = vsub.s32 0, %v83
  %v85 = vrot.slane %v80, %v84
  %v91 = vunpack.c.l.b16 %v76
  %v92 = vunpack.c.l.b16 %v77
  %v93 = vunpack.c.l.b16 %v78
  %v94 = vunpack.c.l.b16 %v79
  %v95 = vpack.c.b16 %v92, %v91
  %v96 = vpack.c.b16 %v94, %v93
  %v100 = vsel %vm31, %v75, 0
  %102 = vmatprep.subr.bf16.mxu0 0
  %103 = vmatpush1.bf16.msra.mxu0 %v95
  %104 = vmatprep.subr.bf16.mxu0 0
  %105 = vmatpush1.bf16.msra.mxu0 %v96
  %106 = vmatprep.subr.bf16.mxu0 0
  %107 = vmatpush1.bf16.msra.mxu0 0
  %108 = vmatprep.subr.bf16.mxu0 0
  %109 = vmatpush1.bf16.msra.mxu0 0
  %110 = vmatprep.subr.bf16.mxu0 0
  %111 = vmatpush1.bf16.msra.mxu0 0
  %112 = vmatprep.subr.bf16.mxu0 0
  %113 = vmatpush1.bf16.msra.mxu0 0
  %114 = vmatprep.subr.bf16.mxu0 0
  %115 = vmatpush1.bf16.msra.mxu0 0
  %116 = vmatprep.subr.bf16.mxu0 0
  %117 = vmatpush1.bf16.msra.mxu0 0
  %118 = vmatprep.subr.bf16.mxu0 0
  %119 = vmatpush1.bf16.msra.mxu0 0
  %120 = vmatprep.subr.bf16.mxu0 0
  %121 = vmatpush1.bf16.msra.mxu0 0
  %122 = vmatprep.subr.bf16.mxu0 0
  %123 = vmatpush1.bf16.msra.mxu0 0
  %124 = vmatprep.subr.bf16.mxu0 0
  %125 = vmatpush1.bf16.msra.mxu0 0
  %126 = vmatprep.subr.bf16.mxu0 0
  %127 = vmatpush1.bf16.msra.mxu0 0
  %128 = vmatprep.subr.bf16.mxu0 0
  %129 = vmatpush1.bf16.msra.mxu0 0
  %130 = vmatprep.subr.bf16.mxu0 0
  %131 = vmatpush1.bf16.msra.mxu0 0
  %132 = vmatprep.subr.bf16.mxu0 0
  %133 = vmatpush1.bf16.msra.mxu0 0
  %134 = vmatprep.mubr.bf16.mxu0 0
  %135 = vmatmul.mubr.bf16.gmra.mrb[0].mxu0 %v100
  %v136 = vpop.f32.mrb[0].mxu0
  %v137 = vadd.f32 %v85, %v136
  %v138 = vpop.f32.mrb[0].mxu0
  %v139 = vpop.f32.mrb[0].mxu0
  %v140 = vadd.f32 %v85, %v139
  %v141 = vpop.f32.mrb[0].mxu0
  %142 = vdwg.mxu0
  %v143 = vmul.f32 %v137, 0.5
  %v144 = vmul.f32 %v140, 0.5
  %v145 = vmul.f32 %v137, %v137
  %v146 = vmul.f32 %v140, %v140
  %v147 = vmul.f32 %v145, %v137
  %v148 = vmul.f32 %v146, %v140
  %v149 = vmul.f32 %v147, 0.044715
  %v150 = vmul.f32 %v148, 0.044715
  %v151 = vadd.f32 %v137, %v149
  %v152 = vadd.f32 %v140, %v150
  %v153 = vmul.f32 %v151, 0.7978846
  %v154 = vmul.f32 %v152, 0.7978846
  %v155 = vtanh.pop %v153
  %v156 = vtanh.pop %v154
  %v157 = vadd.f32 %v155, 1.0
  %v158 = vadd.f32 %v156, 1.0
  %v159 = vmul.f32 %v143, %v157
  %v160 = vmul.f32 %v144, %v158
  %v161 = vpack.c.bf16 %v160, %v159
  %v162 = vld [vmem:[%s5] sm:$0xf]
  %v163 = vld [vmem:[%s5 + $0x4] sm:$0xf]
  %v164 = vld [vmem:[%s5 + $0x8] sm:$0xf]
  %v165 = vld [vmem:[%s5 + $0xc] sm:$0xf]
  %v166 = vld [vmem:[%s5 + $0x10] sm:$0xf]
  %v167 = vld [vmem:[%s5 + $0x14] sm:$0xf]
  %v168 = vld [vmem:[%s5 + $0x18] sm:$0xf]
  %v169 = vld [vmem:[%s5 + $0x1c] sm:$0xf]
  %v170 = vld [vmem:[%s5 + $0x20] sm:$0xf]
  %v171 = vld [vmem:[%s5 + $0x24] sm:$0xf]
  %v172 = vld [vmem:[%s5 + $0x28] sm:$0xf]
  %v173 = vld [vmem:[%s5 + $0x2c] sm:$0xf]
  %v174 = vld [vmem:[%s5 + $0x30] sm:$0xf]
  %v175 = vld [vmem:[%s5 + $0x34] sm:$0xf]
  %v176 = vld [vmem:[%s5 + $0x38] sm:$0xf]
  %v177 = vld [vmem:[%s5 + $0x3c] sm:$0xf]
  %v178 = vld [vmem:[%s6] sm:$0x1]
  %v180 = vlaneseq
  %v181 = vshrl.u32 %v180, 7
  %v182 = vsub.s32 0, %v181
  %v183 = vrot.slane %v178, %v182
  %v201 = vunpack.c.l.b16 %v162
  %v202 = vunpack.c.l.b16 %v163
  %v203 = vunpack.c.l.b16 %v164
  %v204 = vunpack.c.l.b16 %v165
  %v205 = vunpack.c.l.b16 %v166
  %v206 = vunpack.c.l.b16 %v167
  %v207 = vunpack.c.l.b16 %v168
  %v208 = vunpack.c.l.b16 %v169
  %v209 = vunpack.c.l.b16 %v170
  %v210 = vunpack.c.l.b16 %v171
  %v211 = vunpack.c.l.b16 %v172
  %v212 = vunpack.c.l.b16 %v173
  %v213 = vunpack.c.l.b16 %v174
  %v214 = vunpack.c.l.b16 %v175
  %v215 = vunpack.c.l.b16 %v176
  %v216 = vunpack.c.l.b16 %v177
  %v217 = vpack.c.b16 %v202, %v201
  %v218 = vpack.c.b16 %v204, %v203
  %v219 = vpack.c.b16 %v206, %v205
  %v220 = vpack.c.b16 %v208, %v207
  %v221 = vpack.c.b16 %v210, %v209
  %v222 = vpack.c.b16 %v212, %v211
  %v223 = vpack.c.b16 %v214, %v213
  %v224 = vpack.c.b16 %v216, %v215
  %233 = vmatprep.subr.bf16.mxu0 0
  %234 = vmatpush1.bf16.msra.mxu0 %v217
  %235 = vmatprep.subr.bf16.mxu0 0
  %236 = vmatpush1.bf16.msra.mxu0 %v218
  %237 = vmatprep.subr.bf16.mxu0 0
  %238 = vmatpush1.bf16.msra.mxu0 %v219
  %239 = vmatprep.subr.bf16.mxu0 0
  %240 = vmatpush1.bf16.msra.mxu0 %v220
  %241 = vmatprep.subr.bf16.mxu0 0
  %242 = vmatpush1.bf16.msra.mxu0 %v221
  %243 = vmatprep.subr.bf16.mxu0 0
  %244 = vmatpush1.bf16.msra.mxu0 %v222
  %245 = vmatprep.subr.bf16.mxu0 0
  %246 = vmatpush1.bf16.msra.mxu0 %v223
  %247 = vmatprep.subr.bf16.mxu0 0
  %248 = vmatpush1.bf16.msra.mxu0 %v224
  %249 = vmatprep.subr.bf16.mxu0 0
  %250 = vmatpush1.bf16.msra.mxu0 0
  %251 = vmatprep.subr.bf16.mxu0 0
  %252 = vmatpush1.bf16.msra.mxu0 0
  %253 = vmatprep.subr.bf16.mxu0 0
  %254 = vmatpush1.bf16.msra.mxu0 0
  %255 = vmatprep.subr.bf16.mxu0 0
  %256 = vmatpush1.bf16.msra.mxu0 0
  %257 = vmatprep.subr.bf16.mxu0 0
  %258 = vmatpush1.bf16.msra.mxu0 0
  %259 = vmatprep.subr.bf16.mxu0 0
  %260 = vmatpush1.bf16.msra.mxu0 0
  %261 = vmatprep.subr.bf16.mxu0 0
  %262 = vmatpush1.bf16.msra.mxu0 0
  %263 = vmatprep.subr.bf16.mxu0 0
  %264 = vmatpush1.bf16.msra.mxu0 0
  %265 = vmatprep.mubr.bf16.mxu0 0
  %266 = vmatmul.mubr.bf16.gmra.mrb[0].mxu0 %v161
  %v267 = vpop.f32.mrb[0].mxu0
  %v268 = vadd.f32 %v183, %v267
  %v269 = vpop.f32.mrb[0].mxu0
  %v270 = vpop.f32.mrb[0].mxu0
  %v271 = vadd.f32 %v183, %v270
  %v272 = vpop.f32.mrb[0].mxu0
  %273 = vdwg.mxu0
  %v274 = vadd.f32 %v27, %v268
  %v275 = vadd.f32 %v28, %v271
  %276 = vst.msk [vmem:[%s7] sm:$0xff] %vm31, %v274
  %277 = vst.msk [vmem:[%s7 + $0x8] sm:$0xff] %vm31, %v275
  // Predicated region
  $region30: #{kogpt2_chat_forward.6} parent=0 // pred_check
    _
  $region31: #{kogpt2_chat_forward.6} parent=0 // pred_check_branch
    %279 = sbr.rel (0) target = $region33
  $region32: #{kogpt2_chat_forward.6} parent=0 // pred_region
    _
  $region33: #{kogpt2_chat_forward.6} parent=0 // pred_fallthru
    _
  // Predicated region
  $region34: #{kogpt2_chat_forward.6} parent=0 // pred_check
    _
  $region35: #{kogpt2_chat_forward.6} parent=0 // pred_check_branch
    %281 = sbr.rel (0) target = $region37
  $region36: #{kogpt2_chat_forward.6} parent=0 // pred_region
    _
  $region37: #{kogpt2_chat_forward.6} parent=0 // pred_fallthru
    _

// kernel: kogpt2_chat_forward.9
$region0: #{kogpt2_chat_forward.9}
  #allocation0 [shape = 'u32[]', space=smem, size = 0x4, offset = 0x4, fixed_abs, tag = 'smem constant byte address 0x4 - core index']
  #allocation1 [shape = 'u32[144,128]{1,0:T(1,128)}', space=vmem, size = 0x12000, scoped, tag = 'internal scratch']
  %s0 = inlined_call_operand.vmem [shape: f32[16,32], index: 0, kind: input, shape index: {}]
  %s1 = inlined_call_operand.vmem [shape: f32[1,32], index: 1, kind: input, shape index: {}]
  %s2 = inlined_call_operand.vmem [shape: f32[1,32], index: 2, kind: input, shape index: {}]
  %s3 = inlined_call_operand.vmem [shape: bf16[32,256], index: 3, kind: input, shape index: {}]
  %s4 = inlined_call_operand.hbm [shape: f32[16,256], index: 4, kind: output, shape index: {}]
  %s5 = sld [smem:[#allocation0]]
  $region26: #{kogpt2_chat_forward.9} parent=0
    _
  %s7 = ssub.s32 1, %s5
  %s8 = scalar_select 0, %s7, %s5
  $region1: #{kogpt2_chat_forward.9} parent=0
    #allocation2 [shape = 'u8[16384]{0}', space=vmem, size = 0x4000, scoped, tag = 'output window, operand 0, single buffered']
    #allocation3 [shape = 's32[1]{0}', space=sflag, size = 0x4, scoped, tag = 'scoped memory for kogpt2_chat_forward.9']
    %9 = vsyncpa [#allocation3], 0
    // Predicated region
    $region2: #{kogpt2_chat_forward.9} parent=1 // pred_check
      _
    $region3: #{kogpt2_chat_forward.9} parent=1 // pred_check_branch
      %11 = sbr.rel (0) target = $region5
    $region4: #{kogpt2_chat_forward.9} parent=1 // pred_region
      _
    $region5: #{kogpt2_chat_forward.9} parent=1 // pred_fallthru
      _
    // Predicated region
    $region6: #{kogpt2_chat_forward.9} parent=1 // pred_check
      _
    $region7: #{kogpt2_chat_forward.9} parent=1 // pred_check_branch
      %13 = sbr.rel (0) target = $region9
    $region8: #{kogpt2_chat_forward.9} parent=1 // pred_region
      _
    $region9: #{kogpt2_chat_forward.9} parent=1 // pred_fallthru
      _
    // Predicated region
    $region10: #{kogpt2_chat_forward.9} parent=1 // pred_check
      _
    $region11: #{kogpt2_chat_forward.9} parent=1 // pred_check_branch
      %15 = sbr.rel (0) target = $region13
    $region12: #{kogpt2_chat_forward.9} parent=1 // pred_region
      _
    $region13: #{kogpt2_chat_forward.9} parent=1 // pred_fallthru
      _
    // Predicated region
    $region14: #{kogpt2_chat_forward.9} parent=1 // pred_check
      _
    $region15: #{kogpt2_chat_forward.9} parent=1 // pred_check_branch
      %17 = sbr.rel (0) target = $region17
    $region16: #{kogpt2_chat_forward.9} parent=1 // pred_region
      _
    $region17: #{kogpt2_chat_forward.9} parent=1 // pred_fallthru
      _
    %v19 = vld [vmem:[%s0] sm:$0xff]
    %v20 = vld [vmem:[%s0 + $0x8] sm:$0xff]
    %v21 = vld [vmem:[%s1] sm:$0x1]
    %v22 = vld [vmem:[%s2] sm:$0x1]
    %vm23 = vcmask 261120
    %v24 = vsel %vm23, %v19, 0.0
    %25 = vadd.xlane.f32.xlu0 %v24
    %v26 = vpop.xlane.xlu0 %25
    %v27 = vsel %vm23, %v20, 0.0
    %28 = vadd.xlane.f32.xlu0 %v27
    %v29 = vpop.xlane.xlu0 %28
    %v30 = vrcp.pop 32.0
    %v31 = vmul.f32 %v26, %v30
    %v32 = vmul.f32 %v29, %v30
    %v33 = vsub.f32 %v19, %v31
    %v34 = vsub.f32 %v20, %v32
    %v35 = vmul.f32 %v33, %v33
    %v36 = vmul.f32 %v34, %v34
    %v37 = vsel %vm23, %v35, 0.0
    %38 = vadd.xlane.f32.xlu0 %v37
    %v39 = vpop.xlane.xlu0 %38
    %v40 = vsel %vm23, %v36, 0.0
    %41 = vadd.xlane.f32.xlu0 %v40
    %v42 = vpop.xlane.xlu0 %41
    %v43 = vmul.f32 %v39, %v30
    %v44 = vmul.f32 %v42, %v30
    %v45 = vadd.f32 %v43, 1e-05
    %v46 = vadd.f32 %v44, 1e-05
    %v47 = vrsqrt.pop %v45
    %v48 = vrsqrt.pop %v46
    %v49 = vmul.f32 %v33, %v47
    %v50 = vmul.f32 %v34, %v48
    %v52 = vlaneseq
    %v53 = vshrl.u32 %v52, 7
    %v54 = vsub.s32 0, %v53
    %v55 = vrot.slane %v21, %v54
    %v57 = vmul.f32 %v49, %v55
    %v58 = vmul.f32 %v50, %v55
    %v60 = vlaneseq
    %v61 = vshrl.u32 %v60, 7
    %v62 = vsub.s32 0, %v61
    %v63 = vrot.slane %v22, %v62
    %v65 = vadd.f32 %v57, %v63
    %v66 = vadd.f32 %v58, %v63
    %v67 = vpack.c.bf16 %v66, %v65
    %v68 = vld [vmem:[%s3] sm:$0xff]
    %v69 = vld [vmem:[%s3 + $0x8] sm:$0xff]
    %v70 = vld [vmem:[%s3 + $0x10] sm:$0xff]
    %v71 = vld [vmem:[%s3 + $0x18] sm:$0xff]
    %v76 = vunpack.c.l.b16 %v68
    %v77 = vunpack.c.h.b16 %v68
    %v78 = vunpack.c.l.b16 %v69
    %v79 = vunpack.c.h.b16 %v69
    %v80 = vunpack.c.l.b16 %v70
    %v81 = vunpack.c.h.b16 %v70
    %v82 = vunpack.c.l.b16 %v71
    %v83 = vunpack.c.h.b16 %v71
    %v84 = vpack.c.b16 %v78, %v76
    %v85 = vpack.c.b16 %v79, %v77
    %v86 = vpack.c.b16 %v82, %v80
    %v87 = vpack.c.b16 %v83, %v81
    %v93 = vsel %vm23, %v67, 0
    %95 = vmatprep.subr.bf16.mxu0 %v85
    %96 = vmatpush1.bf16.msra.mxu0 %v84
    %97 = vmatprep.subr.bf16.mxu0 %v87
    %98 = vmatpush1.bf16.msra.mxu0 %v86
    %99 = vmatprep.subr.bf16.mxu0 0
    %100 = vmatpush1.bf16.msra.mxu0 0
    %101 = vmatprep.subr.bf16.mxu0 0
    %102 = vmatpush1.bf16.msra.mxu0 0
    %103 = vmatprep.subr.bf16.mxu0 0
    %104 = vmatpush1.bf16.msra.mxu0 0
    %105 = vmatprep.subr.bf16.mxu0 0
    %106 = vmatpush1.bf16.msra.mxu0 0
    %107 = vmatprep.subr.bf16.mxu0 0
    %108 = vmatpush1.bf16.msra.mxu0 0
    %109 = vmatprep.subr.bf16.mxu0 0
    %110 = vmatpush1.bf16.msra.mxu0 0
    %111 = vmatprep.subr.bf16.mxu0 0
    %112 = vmatpush1.bf16.msra.mxu0 0
    %113 = vmatprep.subr.bf16.mxu0 0
    %114 = vmatpush1.bf16.msra.mxu0 0
    %115 = vmatprep.subr.bf16.mxu0 0
    %116 = vmatpush1.bf16.msra.mxu0 0
    %117 = vmatprep.subr.bf16.mxu0 0
    %118 = vmatpush1.bf16.msra.mxu0 0
    %119 = vmatprep.subr.bf16.mxu0 0
    %120 = vmatpush1.bf16.msra.mxu0 0
    %121 = vmatprep.subr.bf16.mxu0 0
    %122 = vmatpush1.bf16.msra.mxu0 0
    %123 = vmatprep.subr.bf16.mxu0 0
    %124 = vmatpush1.bf16.msra.mxu0 0
    %125 = vmatprep.subr.bf16.mxu0 0
    %126 = vmatpush1.bf16.msra.mxu0 0
    %127 = vmatprep.mubr.bf16.mxu0 0
    %128 = vmatmul.mubr.bf16.gmra.mrb[0].mxu0 %v93
    %v129 = vpop.f32.mrb[0].mxu0
    %v130 = vadd.f32 0.0, %v129
    %v131 = vpop.f32.mrb[0].mxu0
    %v132 = vadd.f32 0.0, %v131
    %v133 = vpop.f32.mrb[0].mxu0
    %v134 = vadd.f32 0.0, %v133
    %v135 = vpop.f32.mrb[0].mxu0
    %v136 = vadd.f32 0.0, %v135
    %137 = vdwg.mxu0
    %138 = vst [vmem:[#allocation2] sm:$0xff] %v130
    %139 = vst [vmem:[#allocation2 + $0x8] sm:$0xff] %v132
    %140 = vst [vmem:[#allocation2 + $0x10] sm:$0xff] %v134
    %141 = vst [vmem:[#allocation2 + $0x18] sm:$0xff] %v136
    // Predicated region
    $region18: #{kogpt2_chat_forward.9} parent=1 // pred_check
      _
    $region19: #{kogpt2_chat_forward.9} parent=1 // pred_check_branch
      %143 = sbr.rel (0) target = $region21
    $region20: #{kogpt2_chat_forward.9} parent=1 // pred_region
      %s145 = ssub.s32 512, 512
      %146 = vsyncadd [#allocation3], %s145
      %s147 = sshll.u32 [#allocation2], 4
      %s148 = int_to_ptr.vmem [resolvable:$true] %s147
      %153 = dma.vmem_to_hbm [thread:$0]  %s148, 512, %s4, [#allocation3], 256, 256, 16
    $region21: #{kogpt2_chat_forward.9} parent=1 // pred_fallthru
      _
    // Predicated region
    $region22: #{kogpt2_chat_forward.9} parent=1 // pred_check
      _
    $region23: #{kogpt2_chat_forward.9} parent=1 // pred_check_branch
      %155 = sbr.rel (0) target = $region25
    $region24: #{kogpt2_chat_forward.9} parent=1 // pred_region
      %156 = dma.done [#allocation3], 512
    $region25: #{kogpt2_chat_forward.9} parent=1 // pred_fallthru
      _
    %157 = vsyncpa [#allocation3], 1

// kernel: kogpt2_chat_forward.5
$region0: #{kogpt2_chat_forward.5}
  #allocation0 [shape = 'u32[]', space=smem, size = 0x4, offset = 0x4, fixed_abs, tag = 'smem constant byte address 0x4 - core index']
  #allocation1 [shape = 'u32[144,128]{1,0:T(1,128)}', space=vmem, size = 0x12000, scoped, tag = 'internal scratch']
  %s0 = inlined_call_operand.vmem [shape: f32[16,32], index: 0, kind: input, shape index: {}, may-alias: {0,8}]
  %s1 = inlined_call_operand.vmem [shape: f32[2,1,8], index: 1, kind: input, shape index: {}]
  %s2 = inlined_call_operand.vmem [shape: f32[1,32], index: 2, kind: input, shape index: {}]
  %s3 = inlined_call_operand.vmem [shape: f32[1,32], index: 3, kind: input, shape index: {}]
  %s4 = inlined_call_operand.vmem [shape: bf16[32,96], index: 4, kind: input, shape index: {}]
  %s5 = inlined_call_operand.vmem [shape: f32[1,96], index: 5, kind: input, shape index: {}]
  %s6 = inlined_call_operand.vmem [shape: bf16[32,32], index: 6, kind: input, shape index: {}]
  %s7 = inlined_call_operand.vmem [shape: f32[1,32], index: 7, kind: input, shape index: {}]
  %s8 = inlined_call_operand.vmem [shape: f32[16,32], index: 8, kind: output, shape index: {}, may-alias: {0,8}]
  %s9 = sld [smem:[#allocation0]]
  $region65: #{kogpt2_chat_forward.5} parent=0
    _
  %s11 = ssub.s32 1, %s9
  %s12 = scalar_select 0, %s11, %s9
  loop: start=0, step=1, limit=4
  $region2: #{kogpt2_chat_forward.5} parent=0 // loop_pre_header
    _
  $region3: #{kogpt2_chat_forward.5} parent=0 // loop_header
    %s14 = sphi 0, %s18
    %p15 = scmp.ge.s32.totalorder %s14, 4
    %s24 = sphi 0, %s26
    %s27 = sphi 0, %s24
    %s28 = sphi 0, %s27
    %s44 = sphi 0, %s28
    %s50 = sphi 0, %s52
    %s53 = sphi 0, %s50
    %s54 = sphi 0, %s53
    %s70 = sphi 0, %s54
    %s74 = sphi 0, %s74
    %s76 = sphi 0, %s74
    %s77 = sphi 0, %s76
    %s91 = sphi 0, %s77
    %s95 = sphi 0, %s95
    %s97 = sphi 0, %s95
    %s98 = sphi 0, %s97
    %s112 = sphi 0, %s98
    %s116 = sphi 0, %s116
    %s118 = sphi 0, %s116
    %s119 = sphi 0, %s118
    %s133 = sphi 0, %s119
    %s137 = sphi 0, %s137
    %s139 = sphi 0, %s137
    %s140 = sphi 0, %s139
    %s154 = sphi 0, %s140
    %s158 = sphi 0, %s158
    %s160 = sphi 0, %s158
    %s161 = sphi 0, %s160
    %s175 = sphi 0, %s161
    %s179 = sphi 0, %s179
    %s181 = sphi 0, %s179
    %s182 = sphi 0, %s181
    %s196 = sphi 0, %s182
    %s202 = sphi 0, %s204
    %s205 = sphi 0, %s202
    %s206 = sphi 0, %s205
    %s222 = sphi 0, %s206
  $region4: #{kogpt2_chat_forward.5} parent=0 // loop_header_branch
    %17 = sbr.rel (%p15) target = $region8
  $region5: #{kogpt2_chat_forward.5} parent=0 // loop_body
    %s19 = ssub.s32 %s14, 1
    %s20 = ssub.s32 %s14, 2
    %s21 = sadd.s32 %s14, 1
    %s22 = ssub.s32 %s14, %s21
    %p23 = scmp.eq.s32.totalorder %s22, 0
    %s25 = sadd.s32 %s24, 1
    %s26 = scalar_select %p23, %s24, %s25
    %p29 = pneg %p23
    %p30 = scmp.eq.s32.totalorder %s14, 1
    %p31 = por %p29, %p30
    %p32 = scmp.ne.s32.totalorder %s24, %s27
    %p33 = scmp.eq.s32.totalorder %s14, 0
    %p34 = por %p32, %p33
    %p35 = scmp.ne.s32.totalorder %s24, %s27
    %p36 = scmp.eq.s32.totalorder %s19, 1
    %p37 = por %p35, %p36
    %p38 = scmp.ne.s32.totalorder %s27, %s28
    %p39 = scmp.eq.s32.totalorder %s19, 0
    %p40 = por %p38, %p39
    %p41 = scmp.ne.s32.totalorder %s27, %s28
    %p42 = scmp.eq.s32.totalorder %s20, 1
    %p43 = por %p41, %p42
    %p45 = scmp.ne.s32.totalorder %s28, %s44
    %p46 = scmp.eq.s32.totalorder %s20, 0
    %p47 = por %p45, %p46
    %s48 = ssub.s32 %s14, %s21
    %p49 = scmp.eq.s32.totalorder %s48, 0
    %s51 = sadd.s32 %s50, 1
    %s52 = scalar_select %p49, %s50, %s51
    %p55 = pneg %p49
    %p56 = scmp.eq.s32.totalorder %s14, 1
    %p57 = por %p55, %p56
    %p58 = scmp.ne.s32.totalorder %s50, %s53
    %p59 = scmp.eq.s32.totalorder %s14, 0
    %p60 = por %p58, %p59
    %p61 = scmp.ne.s32.totalorder %s50, %s53
    %p62 = scmp.eq.s32.totalorder %s19, 1
    %p63 = por %p61, %p62
    %p64 = scmp.ne.s32.totalorder %s53, %s54
    %p65 = scmp.eq.s32.totalorder %s19, 0
    %p66 = por %p64, %p65
    %p67 = scmp.ne.s32.totalorder %s53, %s54
    %p68 = scmp.eq.s32.totalorder %s20, 1
    %p69 = por %p67, %p68
    %p71 = scmp.ne.s32.totalorder %s54, %s70
    %p72 = scmp.eq.s32.totalorder %s20, 0
    %p73 = por %p71, %p72
    %s75 = sadd.s32 %s74, 1
    %p78 = scmp.eq.s32.totalorder %s14, 1
    %p79 = scmp.ne.s32.totalorder %s74, %s76
    %p80 = scmp.eq.s32.totalorder %s14, 0
    %p81 = por %p79, %p80
    %p82 = scmp.ne.s32.totalorder %s74, %s76
    %p83 = scmp.eq.s32.totalorder %s19, 1
    %p84 = por %p82, %p83
    %p85 = scmp.ne.s32.totalorder %s76, %s77
    %p86 = scmp.eq.s32.totalorder %s19, 0
    %p87 = por %p85, %p86
    %p88 = scmp.ne.s32.totalorder %s76, %s77
    %p89 = scmp.eq.s32.totalorder %s20, 1
    %p90 = por %p88, %p89
    %p92 = scmp.ne.s32.totalorder %s77, %s91
    %p93 = scmp.eq.s32.totalorder %s20, 0
    %p94 = por %p92, %p93
    %s96 = sadd.s32 %s95, 1
    %p99 = scmp.eq.s32.totalorder %s14, 1
    %p100 = scmp.ne.s32.totalorder %s95, %s97
    %p101 = scmp.eq.s32.totalorder %s14, 0
    %p102 = por %p100, %p101
    %p103 = scmp.ne.s32.totalorder %s95, %s97
    %p104 = scmp.eq.s32.totalorder %s19, 1
    %p105 = por %p103, %p104
    %p106 = scmp.ne.s32.totalorder %s97, %s98
    %p107 = scmp.eq.s32.totalorder %s19, 0
    %p108 = por %p106, %p107
    %p109 = scmp.ne.s32.totalorder %s97, %s98
    %p110 = scmp.eq.s32.totalorder %s20, 1
    %p111 = por %p109, %p110
    %p113 = scmp.ne.s32.totalorder %s98, %s112
    %p114 = scmp.eq.s32.totalorder %s20, 0
    %p115 = por %p113, %p114
    %s117 = sadd.s32 %s116, 1
    %p120 = scmp.eq.s32.totalorder %s14, 1
    %p121 = scmp.ne.s32.totalorder %s116, %s118
    %p122 = scmp.eq.s32.totalorder %s14, 0
    %p123 = por %p121, %p122
    %p124 = scmp.ne.s32.totalorder %s116, %s118
    %p125 = scmp.eq.s32.totalorder %s19, 1
    %p126 = por %p124, %p125
    %p127 = scmp.ne.s32.totalorder %s118, %s119
    %p128 = scmp.eq.s32.totalorder %s19, 0
    %p129 = por %p127, %p128
    %p130 = scmp.ne.s32.totalorder %s118, %s119
    %p131 = scmp.eq.s32.totalorder %s20, 1
    %p132 = por %p130, %p131
    %p134 = scmp.ne.s32.totalorder %s119, %s133
    %p135 = scmp.eq.s32.totalorder %s20, 0
    %p136 = por %p134, %p135
    %s138 = sadd.s32 %s137, 1
    %p141 = scmp.eq.s32.totalorder %s14, 1
    %p142 = scmp.ne.s32.totalorder %s137, %s139
    %p143 = scmp.eq.s32.totalorder %s14, 0
    %p144 = por %p142, %p143
    %p145 = scmp.ne.s32.totalorder %s137, %s139
    %p146 = scmp.eq.s32.totalorder %s19, 1
    %p147 = por %p145, %p146
    %p148 = scmp.ne.s32.totalorder %s139, %s140
    %p149 = scmp.eq.s32.totalorder %s19, 0
    %p150 = por %p148, %p149
    %p151 = scmp.ne.s32.totalorder %s139, %s140
    %p152 = scmp.eq.s32.totalorder %s20, 1
    %p153 = por %p151, %p152
    %p155 = scmp.ne.s32.totalorder %s140, %s154
    %p156 = scmp.eq.s32.totalorder %s20, 0
    %p157 = por %p155, %p156
    %s159 = sadd.s32 %s158, 1
    %p162 = scmp.eq.s32.totalorder %s14, 1
    %p163 = scmp.ne.s32.totalorder %s158, %s160
    %p164 = scmp.eq.s32.totalorder %s14, 0
    %p165 = por %p163, %p164
    %p166 = scmp.ne.s32.totalorder %s158, %s160
    %p167 = scmp.eq.s32.totalorder %s19, 1
    %p168 = por %p166, %p167
    %p169 = scmp.ne.s32.totalorder %s160, %s161
    %p170 = scmp.eq.s32.totalorder %s19, 0
    %p171 = por %p169, %p170
    %p172 = scmp.ne.s32.totalorder %s160, %s161
    %p173 = scmp.eq.s32.totalorder %s20, 1
    %p174 = por %p172, %p173
    %p176 = scmp.ne.s32.totalorder %s161, %s175
    %p177 = scmp.eq.s32.totalorder %s20, 0
    %p178 = por %p176, %p177
    %s180 = sadd.s32 %s179, 1
    %p183 = scmp.eq.s32.totalorder %s14, 1
    %p184 = scmp.ne.s32.totalorder %s179, %s181
    %p185 = scmp.eq.s32.totalorder %s14, 0
    %p186 = por %p184, %p185
    %p187 = scmp.ne.s32.totalorder %s179, %s181
    %p188 = scmp.eq.s32.totalorder %s19, 1
    %p189 = por %p187, %p188
    %p190 = scmp.ne.s32.totalorder %s181, %s182
    %p191 = scmp.eq.s32.totalorder %s19, 0
    %p192 = por %p190, %p191
    %p193 = scmp.ne.s32.totalorder %s181, %s182
    %p194 = scmp.eq.s32.totalorder %s20, 1
    %p195 = por %p193, %p194
    %p197 = scmp.ne.s32.totalorder %s182, %s196
    %p198 = scmp.eq.s32.totalorder %s20, 0
    %p199 = por %p197, %p198
    %s200 = ssub.s32 %s14, %s21
    %p201 = scmp.eq.s32.totalorder %s200, 0
    %s203 = sadd.s32 %s202, 1
    %s204 = scalar_select %p201, %s202, %s203
    %p207 = pneg %p201
    %p208 = scmp.eq.s32.totalorder %s14, 1
    %p209 = por %p207, %p208
    %p210 = scmp.ne.s32.totalorder %s202, %s205
    %p211 = scmp.eq.s32.totalorder %s14, 0
    %p212 = por %p210, %p211
    %p213 = scmp.ne.s32.totalorder %s202, %s205
    %p214 = scmp.eq.s32.totalorder %s19, 1
    %p215 = por %p213, %p214
    %p216 = scmp.ne.s32.totalorder %s205, %s206
    %p217 = scmp.eq.s32.totalorder %s19, 0
    %p218 = por %p216, %p217
    %p219 = scmp.ne.s32.totalorder %s205, %s206
    %p220 = scmp.eq.s32.totalorder %s20, 1
    %p221 = por %p219, %p220
    %p223 = scmp.ne.s32.totalorder %s206, %s222
    %p224 = scmp.eq.s32.totalorder %s20, 0
    %p225 = por %p223, %p224
    %p226 = scmp.le.s32.totalorder 1, %s14
    %p227 = scmp.lt.s32.totalorder %s14, 3
    %p228 = pnand %p226, %p227
    %p229 = pneg %p228
    // Predicated region
    $region9: #{kogpt2_chat_forward.5} parent=5 // pred_check
      _
    $region10: #{kogpt2_chat_forward.5} parent=5 // pred_check_branch
      %231 = sbr.rel (%p228) target = $region12
    $region11: #{kogpt2_chat_forward.5} parent=5 // pred_region
      %s232 = ssub.s32 %s14, 1
      // Predicated region
      $region13: #{kogpt2_chat_forward.5} parent=11 // pred_check
        %p233 = pneg %p87
      $region14: #{kogpt2_chat_forward.5} parent=11 // pred_check_branch
        %235 = sbr.rel (%p233) target = $region16
      $region15: #{kogpt2_chat_forward.5} parent=11 // pred_region
        _
      $region16: #{kogpt2_chat_forward.5} parent=11 // pred_fallthru
        _
      // Predicated region
      $region17: #{kogpt2_chat_forward.5} parent=11 // pred_check
        %p236 = pneg %p108
      $region18: #{kogpt2_chat_forward.5} parent=11 // pred_check_branch
        %238 = sbr.rel (%p236) target = $region20
      $region19: #{kogpt2_chat_forward.5} parent=11 // pred_region
        _
      $region20: #{kogpt2_chat_forward.5} parent=11 // pred_fallthru
        _
      // Predicated region
      $region21: #{kogpt2_chat_forward.5} parent=11 // pred_check
        %p239 = pneg %p129
      $region22: #{kogpt2_chat_forward.5} parent=11 // pred_check_branch
        %241 = sbr.rel (%p239) target = $region24
      $region23: #{kogpt2_chat_forward.5} parent=11 // pred_region
        _
      $region24: #{kogpt2_chat_forward.5} parent=11 // pred_fallthru
        _
      // Predicated region
      $region25: #{kogpt2_chat_forward.5} parent=11 // pred_check
        %p242 = pneg %p150
      $region26: #{kogpt2_chat_forward.5} parent=11 // pred_check_branch
        %244 = sbr.rel (%p242) target = $region28
      $region27: #{kogpt2_chat_forward.5} parent=11 // pred_region
        _
      $region28: #{kogpt2_chat_forward.5} parent=11 // pred_fallthru
        _
      // Predicated region
      $region29: #{kogpt2_chat_forward.5} parent=11 // pred_check
        %p245 = pneg %p171
      $region30: #{kogpt2_chat_forward.5} parent=11 // pred_check_branch
        %247 = sbr.rel (%p245) target = $region32
      $region31: #{kogpt2_chat_forward.5} parent=11 // pred_region
        _
      $region32: #{kogpt2_chat_forward.5} parent=11 // pred_fallthru
        _
      // Predicated region
      $region33: #{kogpt2_chat_forward.5} parent=11 // pred_check
        %p248 = pneg %p192
      $region34: #{kogpt2_chat_forward.5} parent=11 // pred_check_branch
        %250 = sbr.rel (%p248) target = $region36
      $region35: #{kogpt2_chat_forward.5} parent=11 // pred_region
        _
      $region36: #{kogpt2_chat_forward.5} parent=11 // pred_fallthru
        _
    $region12: #{kogpt2_chat_forward.5} parent=5 // pred_fallthru
      _
    %p251 = scmp.lt.s32.totalorder %s14, 2
    // Predicated region
    $region37: #{kogpt2_chat_forward.5} parent=5 // pred_check
      %p252 = pneg %p251
    $region38: #{kogpt2_chat_forward.5} parent=5 // pred_check_branch
      %254 = sbr.rel (%p252) target = $region40
    $region39: #{kogpt2_chat_forward.5} parent=5 // pred_region
      // Predicated region
      $region41: #{kogpt2_chat_forward.5} parent=39 // pred_check
        %p255 = pneg %p34
      $region42: #{kogpt2_chat_forward.5} parent=39 // pred_check_branch
        %257 = sbr.rel (%p255) target = $region44
      $region43: #{kogpt2_chat_forward.5} parent=39 // pred_region
        %p258 = scmp.lt.s32.totalorder %s14, 1
        %s259 = scalar_select %p258, %s14, 1
        %s260 = smul.addr %s259, 8
        %s261 = scalar_lea.vmem %s0, %s260
      $region44: #{kogpt2_chat_forward.5} parent=39 // pred_fallthru
        _
      // Predicated region
      $region45: #{kogpt2_chat_forward.5} parent=39 // pred_check
        %p262 = pneg %p60
      $region46: #{kogpt2_chat_forward.5} parent=39 // pred_check_branch
        %264 = sbr.rel (%p262) target = $region48
      $region47: #{kogpt2_chat_forward.5} parent=39 // pred_region
        %p265 = scmp.lt.s32.totalorder %s14, 1
        %s266 = scalar_select %p265, %s14, 1
        %s267 = scalar_lea.vmem %s1, %s266
      $region48: #{kogpt2_chat_forward.5} parent=39 // pred_fallthru
        _
    $region40: #{kogpt2_chat_forward.5} parent=5 // pred_fallthru
      _
    %p268 = scmp.le.s32.totalorder 1, %s14
    %p269 = scmp.lt.s32.totalorder %s14, 3
    %p270 = pnand %p268, %p269
    %p271 = pneg %p270
    // Predicated region
    $region49: #{kogpt2_chat_forward.5} parent=5 // pred_check
      _
    $region50: #{kogpt2_chat_forward.5} parent=5 // pred_check_branch
      %273 = sbr.rel (%p270) target = $region52
    $region51: #{kogpt2_chat_forward.5} parent=5 // pred_region
      %s274 = ssub.s32 %s14, 1
      %p275 = scmp.lt.s32.totalorder %s19, 1
      %s276 = scalar_select %p275, %s19, 1
      %s277 = smul.addr %s276, 8
      %s278 = scalar_lea.vmem %s0, %s277
      %p279 = pneg %p40
      %p280 = pneg %p37
      %p281 = scmp.lt.s32.totalorder %s19, 1
      %s282 = scalar_select %p281, %s19, 1
      %s283 = scalar_lea.vmem %s1, %s282
      %p284 = pneg %p66
      %p285 = pneg %p63
      %p286 = pneg %p87
      %p287 = pneg %p84
      %p288 = pneg %p108
      %p289 = pneg %p105
      %p290 = pneg %p129
      %p291 = pneg %p126
      %p292 = pneg %p150
      %p293 = pneg %p147
      %p294 = pneg %p171
      %p295 = pneg %p168
      %p296 = pneg %p192
      %p297 = pneg %p189
      %p298 = pneg %p218
      %p299 = pneg %p215
      %p300 = scmp.lt.s32.totalorder %s19, 1
      %s301 = scalar_select %p300, %s19, 1
      %s302 = smul.addr %s301, 8
      %s303 = scalar_lea.vmem %s8, %s302
      %p304 = scmp.lt.s32.totalorder %s19, 1
      %s305 = scalar_select %p304, %s19, 1
      %s306 = smul.addr %s305, 8
      %s307 = scalar_lea.vmem %s0, %s306
      %p308 = scmp.lt.s32.totalorder %s19, 1
      %s309 = scalar_select %p308, %s19, 1
      %s310 = scalar_lea.vmem %s1, %s309
      %p311 = scmp.lt.s32.totalorder %s19, 1
      %s312 = scalar_select %p311, %s19, 1
      %s313 = smul.addr %s312, 8
      %s314 = scalar_lea.vmem %s8, %s313
      %v316 = vld [vmem:[%s307] sm:$0xff]
      %v317 = vld [vmem:[%s2] sm:$0x1]
      %v318 = vld [vmem:[%s3] sm:$0x1]
      %vm319 = vcmask 261120
      %v320 = vsel %vm319, %v316, 0.0
      %321 = vadd.xlane.f32.xlu0 %v320
      %v322 = vpop.xlane.xlu0 %321
      %v323 = vrcp.pop 32.0
      %v324 = vmul.f32 %v322, %v323
      %v325 = vsub.f32 %v316, %v324
      %v326 = vmul.f32 %v325, %v325
      %v327 = vsel %vm319, %v326, 0.0
      %328 = vadd.xlane.f32.xlu0 %v327
      %v329 = vpop.xlane.xlu0 %328
      %v330 = vmul.f32 %v329, %v323
      %v331 = vadd.f32 %v330, 1e-05
      %v332 = vrsqrt.pop %v331
      %v333 = vmul.f32 %v325, %v332
      %v335 = vlaneseq
      %v336 = vshrl.u32 %v335, 7
      %v337 = vsub.s32 0, %v336
      %v338 = vrot.slane %v317, %v337
      %v340 = vmul.f32 %v333, %v338
      %v342 = vlaneseq
      %v343 = vshrl.u32 %v342, 7
      %v344 = vsub.s32 0, %v343
      %v345 = vrot.slane %v318, %v344
      %v347 = vadd.f32 %v340, %v345
      %v348 = vpack.c.bf16 %v347, %v347
      %v349 = vld [vmem:[%s4] sm:$0xf]
      %v350 = vld [vmem:[%s4 + $0x4] sm:$0xf]
      %v351 = vld [vmem:[%s4 + $0x8] sm:$0xf]
      %v352 = vld [vmem:[%s4 + $0xc] sm:$0xf]
      %v353 = vld [vmem:[%s5] sm:$0x1]
      %v355 = vlaneseq
      %v356 = vshrl.u32 %v355, 7
      %v357 = vsub.s32 0, %v356
      %v358 = vrot.slane %v353, %v357
      %v364 = vunpack.c.l.b16 %v349
      %v365 = vunpack.c.l.b16 %v350
      %v366 = vunpack.c.l.b16 %v351
      %v367 = vunpack.c.l.b16 %v352
      %v368 = vpack.c.b16 %v365, %v364
      %v369 = vpack.c.b16 %v367, %v366
      %v373 = vsel %vm319, %v348, 0
      %375 = vmatprep.subr.bf16.mxu0 0
      %376 = vmatpush1.bf16.msra.mxu0 %v368
      %377 = vmatprep.subr.bf16.mxu0 0
      %378 = vmatpush1.bf16.msra.mxu0 %v369
      %379 = vmatprep.subr.bf16.mxu0 0
      %380 = vmatpush1.bf16.msra.mxu0 0
      %381 = vmatprep.subr.bf16.mxu0 0
      %382 = vmatpush1.bf16.msra.mxu0 0
      %383 = vmatprep.subr.bf16.mxu0 0
      %384 = vmatpush1.bf16.msra.mxu0 0
      %385 = vmatprep.subr.bf16.mxu0 0
      %386 = vmatpush1.bf16.msra.mxu0 0
      %387 = vmatprep.subr.bf16.mxu0 0
      %388 = vmatpush1.bf16.msra.mxu0 0
      %389 = vmatprep.subr.bf16.mxu0 0
      %390 = vmatpush1.bf16.msra.mxu0 0
      %391 = vmatprep.subr.bf16.mxu0 0
      %392 = vmatpush1.bf16.msra.mxu0 0
      %393 = vmatprep.subr.bf16.mxu0 0
      %394 = vmatpush1.bf16.msra.mxu0 0
      %395 = vmatprep.subr.bf16.mxu0 0
      %396 = vmatpush1.bf16.msra.mxu0 0
      %397 = vmatprep.subr.bf16.mxu0 0
      %398 = vmatpush1.bf16.msra.mxu0 0
      %399 = vmatprep.subr.bf16.mxu0 0
      %400 = vmatpush1.bf16.msra.mxu0 0
      %401 = vmatprep.subr.bf16.mxu0 0
      %402 = vmatpush1.bf16.msra.mxu0 0
      %403 = vmatprep.subr.bf16.mxu0 0
      %404 = vmatpush1.bf16.msra.mxu0 0
      %405 = vmatprep.subr.bf16.mxu0 0
      %406 = vmatpush1.bf16.msra.mxu0 0
      %407 = vmatprep.mubr.bf16.mxu0 0
      %408 = vmatmul.mubr.bf16.gmra.mrb[0].mxu0 %v373
      %v409 = vpop.f32.mrb[0].mxu0
      %v410 = vadd.f32 %v358, %v409
      %v411 = vpop.f32.mrb[0].mxu0
      %v412 = vpop.f32.mrb[0].mxu0
      %v413 = vpop.f32.mrb[0].mxu0
      %414 = vdwg.mxu0
      %v415 = vlaneseq
      %v416 = vshrl.u32 %v415, 7
      %v417 = vlaneseq
      %v418 = vand.u32 %v417, 127
      %v419 = vld [vmem:[%s310] sm:$0x1]
      %vm420 = vcmp.ge.s32.totalorder %v416, %v418
      %v421 = vsel %vm420, 0.0, -1e+09
      %v422 = vsub.f32 1.0, %v419
      %v423 = vmul.f32 %v422, -1e+09
      %v425 = vlaneseq
      %v426 = vshrl.u32 %v425, 7
      %v427 = vsub.s32 0, %v426
      %v428 = vrot.slane %v423, %v427
      %v430 = vadd.f32 %v421, %v428
      %v431 = vpack.c.bf16 %v410, %v410
      %433 = vrot.lane.b32.xlu0 %v431, 96
      %v434 = vpop.permute.xlu0 %433
      %vm435 = vcmask 130048
      %v437 = vsel %vm435, %v431, 0
      %v440 = vsel %vm435, %v434, 0
      %442 = vmatprep.subr.bf16.mxu0 0
      %443 = vmatpush1.bf16.xpose.msra.mxu0 %v440
      %444 = vmatprep.subr.bf16.mxu0 0
      %445 = vmatpush1.bf16.xpose.msra.mxu0 0
      %446 = vmatprep.subr.bf16.mxu0 0
      %447 = vmatpush1.bf16.xpose.msra.mxu0 0
      %448 = vmatprep.subr.bf16.mxu0 0
      %449 = vmatpush1.bf16.xpose.msra.mxu0 0
      %450 = vmatprep.subr.bf16.mxu0 0
      %451 = vmatpush1.bf16.xpose.msra.mxu0 0
      %452 = vmatprep.subr.bf16.mxu0 0
      %453 = vmatpush1.bf16.xpose.msra.mxu0 0
      %454 = vmatprep.subr.bf16.mxu0 0
      %455 = vmatpush1.bf16.xpose.msra.mxu0 0
      %456 = vmatprep.subr.bf16.mxu0 0
      %457 = vmatpush1.bf16.xpose.msra.mxu0 0
      %458 = vmatprep.subr.bf16.mxu0 0
      %459 = vmatpush1.bf16.xpose.msra.mxu0 0
      %460 = vmatprep.subr.bf16.mxu0 0
      %461 = vmatpush1.bf16.xpose.msra.mxu0 0
      %462 = vmatprep.subr.bf16.mxu0 0
      %463 = vmatpush1.bf16.xpose.msra.mxu0 0
      %464 = vmatprep.subr.bf16.mxu0 0
      %465 = vmatpush1.bf16.xpose.msra.mxu0 0
      %466 = vmatprep.subr.bf16.mxu0 0
      %467 = vmatpush1.bf16.xpose.msra.mxu0 0
      %468 = vmatprep.subr.bf16.mxu0 0
      %469 = vmatpush1.bf16.xpose.msra.mxu0 0
      %470 = vmatprep.subr.bf16.mxu0 0
      %471 = vmatpush1.bf16.xpose.msra.mxu0 0
      %472 = vmatprep.subr.bf16.mxu0 0
      %473 = vmatpush1.bf16.xpose.msra.mxu0 0
      %474 = vmatprep.mubr.bf16.mxu0 0
      %475 = vmatmul.mubr.bf16.gmra.mrb[0].mxu0 %v437
      %v476 = vpop.f32.mrb[0].mxu0
      %v477 = vadd.f32 0.0, %v476
      %v478 = vpop.f32.mrb[0].mxu0
      %v479 = vpop.f32.mrb[0].mxu0
      %v480 = vpop.f32.mrb[0].mxu0
      %481 = vdwg.mxu0
      %v482 = vmul.f32 %v477, 0.25
      %v483 = vadd.f32 %v482, %v430
      %vm484 = vcmask 64512
      %v485 = vsel %vm484, %v483, -inf
      %486 = vmax.xlane.f32.xlu0 %v485
      %v487 = vpop.xlane.xlu0 %486
      %v488 = vsub.f32 %v483, %v487
      %v489 = vmul.f32 %v488, 1.442695
      %v490 = vpow.pop %v489
      %v491 = vsel %vm484, %v490, 0.0
      %492 = vadd.xlane.f32.xlu0 %v491
      %v493 = vpop.xlane.xlu0 %492
      %v494 = vrcp.pop %v493
      %v495 = vmul.f32 %v490, %v494
      %v496 = vpack.c.bf16 %v495, %v495
      %497 = vrot.lane.b32.xlu0 %v431, 64
      %v498 = vpop.permute.xlu0 %497
      %v500 = vsel %vm484, %v496, 0
      %vm502 = vcmask 1043456
      %v504 = vsel %vm502, %v498, 0
      %506 = vmatprep.subr.bf16.mxu0 0
      %507 = vmatpush1.bf16.msra.mxu0 %v504
      %508 = vmatprep.subr.bf16.mxu0 0
      %509 = vmatpush1.bf16.msra.mxu0 0
      %510 = vmatprep.subr.bf16.mxu0 0
      %511 = vmatpush1.bf16.msra.mxu0 0
      %512 = vmatprep.subr.bf16.mxu0 0
      %513 = vmatpush1.bf16.msra.mxu0 0
      %514 = vmatprep.subr.bf16.mxu0 0
      %515 = vmatpush1.bf16.msra.mxu0 0
      %516 = vmatprep.subr.bf16.mxu0 0
      %517 = vmatpush1.bf16.msra.mxu0 0
      %518 = vmatprep.subr.bf16.mxu0 0
      %519 = vmatpush1.bf16.msra.mxu0 0
      %520 = vmatprep.subr.bf16.mxu0 0
      %521 = vmatpush1.bf16.msra.mxu0 0
      %522 = vmatprep.subr.bf16.mxu0 0
      %523 = vmatpush1.bf16.msra.mxu0 0
      %524 = vmatprep.subr.bf16.mxu0 0
      %525 = vmatpush1.bf16.msra.mxu0 0
      %526 = vmatprep.subr.bf16.mxu0 0
      %527 = vmatpush1.bf16.msra.mxu0 0
      %528 = vmatprep.subr.bf16.mxu0 0
      %529 = vmatpush1.bf16.msra.mxu0 0
      %530 = vmatprep.subr.bf16.mxu0 0
      %531 = vmatpush1.bf16.msra.mxu0 0
      %532 = vmatprep.subr.bf16.mxu0 0
      %533 = vmatpush1.bf16.msra.mxu0 0
      %534 = vmatprep.subr.bf16.mxu0 0
      %535 = vmatpush1.bf16.msra.mxu0 0
      %536 = vmatprep.subr.bf16.mxu0 0
      %537 = vmatpush1.bf16.msra.mxu0 0
      %538 = vmatprep.mubr.bf16.mxu0 0
      %539 = vmatmul.mubr.bf16.gmra.mrb[0].mxu0 %v500
      %v540 = vpop.f32.mrb[0].mxu0
      %v541 = vadd.f32 0.0, %v540
      %v542 = vpop.f32.mrb[0].mxu0
      %v543 = vpop.f32.mrb[0].mxu0
      %v544 = vpop.f32.mrb[0].mxu0
      %545 = vdwg.mxu0
      %546 = vrot.lane.b32.xlu0 %v431, 112
      %v547 = vpop.permute.xlu0 %546
      %548 = vrot.lane.b32.xlu0 %v431, 80
      %v549 = vpop.permute.xlu0 %548
      %v551 = vsel %vm435, %v547, 0
      %v554 = vsel %vm435, %v549, 0
      %556 = vmatprep.subr.bf16.mxu0 0
      %557 = vmatpush1.bf16.xpose.msra.mxu0 %v554
      %558 = vmatprep.subr.bf16.mxu0 0
      %559 = vmatpush1.bf16.xpose.msra.mxu0 0
      %560 = vmatprep.subr.bf16.mxu0 0
      %561 = vmatpush1.bf16.xpose.msra.mxu0 0
      %562 = vmatprep.subr.bf16.mxu0 0
      %563 = vmatpush1.bf16.xpose.msra.mxu0 0
      %564 = vmatprep.subr.bf16.mxu0 0
      %565 = vmatpush1.bf16.xpose.msra.mxu0 0
      %566 = vmatprep.subr.bf16.mxu0 0
      %567 = vmatpush1.bf16.xpose.msra.mxu0 0
      %568 = vmatprep.subr.bf16.mxu0 0
      %569 = vmatpush1.bf16.xpose.msra.mxu0 0
      %570 = vmatprep.subr.bf16.mxu0 0
      %571 = vmatpush1.bf16.xpose.msra.mxu0 0
      %572 = vmatprep.subr.bf16.mxu0 0
      %573 = vmatpush1.bf16.xpose.msra.mxu0 0
      %574 = vmatprep.subr.bf16.mxu0 0
      %575 = vmatpush1.bf16.xpose.msra.mxu0 0
      %576 = vmatprep.subr.bf16.mxu0 0
      %577 = vmatpush1.bf16.xpose.msra.mxu0 0
      %578 = vmatprep.subr.bf16.mxu0 0
      %579 = vmatpush1.bf16.xpose.msra.mxu0 0
      %580 = vmatprep.subr.bf16.mxu0 0
      %581 = vmatpush1.bf16.xpose.msra.mxu0 0
      %582 = vmatprep.subr.bf16.mxu0 0
      %583 = vmatpush1.bf16.xpose.msra.mxu0 0
      %584 = vmatprep.subr.bf16.mxu0 0
      %585 = vmatpush1.bf16.xpose.msra.mxu0 0
      %586 = vmatprep.subr.bf16.mxu0 0
      %587 = vmatpush1.bf16.xpose.msra.mxu0 0
      %588 = vmatprep.mubr.bf16.mxu0 0
      %589 = vmatmul.mubr.bf16.gmra.mrb[0].mxu0 %v551
      %v590 = vpop.f32.mrb[0].mxu0
      %v591 = vadd.f32 0.0, %v590
      %v592 = vpop.f32.mrb[0].mxu0
      %v593 = vpop.f32.mrb[0].mxu0
      %v594 = vpop.f32.mrb[0].mxu0
      %595 = vdwg.mxu0
      %v596 = vmul.f32 %v591, 0.25
      %v597 = vadd.f32 %v596, %v430
      %v598 = vsel %vm484, %v597, -inf
      %599 = vmax.xlane.f32.xlu0 %v598
      %v600 = vpop.xlane.xlu0 %599
      %v601 = vsub.f32 %v597, %v600
      %v602 = vmul.f32 %v601, 1.442695
      %v603 = vpow.pop %v602
      %v604 = vsel %vm484, %v603, 0.0
      %605 = vadd.xlane.f32.xlu0 %v604
      %v606 = vpop.xlane.xlu0 %605
      %v607 = vrcp.pop %v606
      %v608 = vmul.f32 %v603, %v607
      %v609 = vpack.c.bf16 %v608, %v608
      %610 = vrot.lane.b32.xlu0 %v431, 48
      %v611 = vpop.permute.xlu0 %610
      %v613 = vsel %vm484, %v609, 0
      %v616 = vsel %vm502, %v611, 0
      %618 = vmatprep.subr.bf16.mxu0 0
      %619 = vmatpush1.bf16.msra.mxu0 %v616
      %620 = vmatprep.subr.bf16.mxu0 0
      %621 = vmatpush1.bf16.msra.mxu0 0
      %622 = vmatprep.subr.bf16.mxu0 0
      %623 = vmatpush1.bf16.msra.mxu0 0
      %624 = vmatprep.subr.bf16.mxu0 0
      %625 = vmatpush1.bf16.msra.mxu0 0
      %626 = vmatprep.subr.bf16.mxu0 0
      %627 = vmatpush1.bf16.msra.mxu0 0
      %628 = vmatprep.subr.bf16.mxu0 0
      %629 = vmatpush1.bf16.msra.mxu0 0
      %630 = vmatprep.subr.bf16.mxu0 0
      %631 = vmatpush1.bf16.msra.mxu0 0
      %632 = vmatprep.subr.bf16.mxu0 0
      %633 = vmatpush1.bf16.msra.mxu0 0
      %634 = vmatprep.subr.bf16.mxu0 0
      %635 = vmatpush1.bf16.msra.mxu0 0
      %636 = vmatprep.subr.bf16.mxu0 0
      %637 = vmatpush1.bf16.msra.mxu0 0
      %638 = vmatprep.subr.bf16.mxu0 0
      %639 = vmatpush1.bf16.msra.mxu0 0
      %640 = vmatprep.subr.bf16.mxu0 0
      %641 = vmatpush1.bf16.msra.mxu0 0
      %642 = vmatprep.subr.bf16.mxu0 0
      %643 = vmatpush1.bf16.msra.mxu0 0
      %644 = vmatprep.subr.bf16.mxu0 0
      %645 = vmatpush1.bf16.msra.mxu0 0
      %646 = vmatprep.subr.bf16.mxu0 0
      %647 = vmatpush1.bf16.msra.mxu0 0
      %648 = vmatprep.subr.bf16.mxu0 0
      %649 = vmatpush1.bf16.msra.mxu0 0
      %650 = vmatprep.mubr.bf16.mxu0 0
      %651 = vmatmul.mubr.bf16.gmra.mrb[0].mxu0 %v613
      %v652 = vpop.f32.mrb[0].mxu0
      %v653 = vadd.f32 0.0, %v652
      %v654 = vpop.f32.mrb[0].mxu0
      %v655 = vpop.f32.mrb[0].mxu0
      %v656 = vpop.f32.mrb[0].mxu0
      %657 = vdwg.mxu0
      %659 = vrot.lane.b32.xlu0 %v653, 16
      %v660 = vpop.permute.xlu0 %659
      %v662 = vsel %vm435, %v541, %v660
      %v663 = vpack.c.bf16 %v662, %v662
      %v664 = vld [vmem:[%s6] sm:$0xf]
      %v665 = vld [vmem:[%s6 + $0x4] sm:$0xf]
      %v666 = vld [vmem:[%s6 + $0x8] sm:$0xf]
      %v667 = vld [vmem:[%s6 + $0xc] sm:$0xf]
      %v668 = vld [vmem:[%s7] sm:$0x1]
      %v670 = vlaneseq
      %v671 = vshrl.u32 %v670, 7
      %v672 = vsub.s32 0, %v671
      %v673 = vrot.slane %v668, %v672
      %v679 = vunpack.c.l.b16 %v664
      %v680 = vunpack.c.l.b16 %v665
      %v681 = vunpack.c.l.b16 %v666
      %v682 = vunpack.c.l.b16 %v667
      %v683 = vpack.c.b16 %v680, %v679
      %v684 = vpack.c.b16 %v682, %v681
      %v688 = vsel %vm319, %v663, 0
      %690 = vmatprep.subr.bf16.mxu0 0
      %691 = vmatpush1.bf16.msra.mxu0 %v683
      %692 = vmatprep.subr.bf16.mxu0 0
      %693 = vmatpush1.bf16.msra.mxu0 %v684
      %694 = vmatprep.subr.bf16.mxu0 0
      %695 = vmatpush1.bf16.msra.mxu0 0
      %696 = vmatprep.subr.bf16.mxu0 0
      %697 = vmatpush1.bf16.msra.mxu0 0
      %698 = vmatprep.subr.bf16.mxu0 0
      %699 = vmatpush1.bf16.msra.mxu0 0
      %700 = vmatprep.subr.bf16.mxu0 0
      %701 = vmatpush1.bf16.msra.mxu0 0
      %702 = vmatprep.subr.bf16.mxu0 0
      %703 = vmatpush1.bf16.msra.mxu0 0
      %704 = vmatprep.subr.bf16.mxu0 0
      %705 = vmatpush1.bf16.msra.mxu0 0
      %706 = vmatprep.subr.bf16.mxu0 0
      %707 = vmatpush1.bf16.msra.mxu0 0
      %708 = vmatprep.subr.bf16.mxu0 0
      %709 = vmatpush1.bf16.msra.mxu0 0
      %710 = vmatprep.subr.bf16.mxu0 0
      %711 = vmatpush1.bf16.msra.mxu0 0
      %712 = vmatprep.subr.bf16.mxu0 0
      %713 = vmatpush1.bf16.msra.mxu0 0
      %714 = vmatprep.subr.bf16.mxu0 0
      %715 = vmatpush1.bf16.msra.mxu0 0
      %716 = vmatprep.subr.bf16.mxu0 0
      %717 = vmatpush1.bf16.msra.mxu0 0
      %718 = vmatprep.subr.bf16.mxu0 0
      %719 = vmatpush1.bf16.msra.mxu0 0
      %720 = vmatprep.subr.bf16.mxu0 0
      %721 = vmatpush1.bf16.msra.mxu0 0
      %722 = vmatprep.mubr.bf16.mxu0 0
      %723 = vmatmul.mubr.bf16.gmra.mrb[0].mxu0 %v688
      %v724 = vpop.f32.mrb[0].mxu0
      %v725 = vadd.f32 %v673, %v724
      %v726 = vpop.f32.mrb[0].mxu0
      %v727 = vpop.f32.mrb[0].mxu0
      %v728 = vpop.f32.mrb[0].mxu0
      %729 = vdwg.mxu0
      %v730 = vadd.f32 %v316, %v725
      %731 = vst.msk [vmem:[%s314] sm:$0xff] %vm319, %v730
      %p732 = scmp.lt.s32.totalorder %s19, 1
      %s733 = scalar_select %p732, %s19, 1
      %s734 = smul.addr %s733, 8
      %s735 = scalar_lea.vmem %s8, %s734
      // Predicated region
      $region53: #{kogpt2_chat_forward.5} parent=51 // pred_check
        %p736 = pneg %p215
      $region54: #{kogpt2_chat_forward.5} parent=51 // pred_check_branch
        %738 = sbr.rel (%p736) target = $region56
      $region55: #{kogpt2_chat_forward.5} parent=51 // pred_region
        _
      $region56: #{kogpt2_chat_forward.5} parent=51 // pred_fallthru
        _
    $region52: #{kogpt2_chat_forward.5} parent=5 // pred_fallthru
      _
    %p739 = scmp.le.s32.totalorder 2, %s14
    // Predicated region
    $region57: #{kogpt2_chat_forward.5} parent=5 // pred_check
      %p740 = pneg %p739
    $region58: #{kogpt2_chat_forward.5} parent=5 // pred_check_branch
      %742 = sbr.rel (%p740) target = $region60
    $region59: #{kogpt2_chat_forward.5} parent=5 // pred_region
      %s743 = ssub.s32 %s14, 2
      // Predicated region
      $region61: #{kogpt2_chat_forward.5} parent=59 // pred_check
        %p744 = pneg %p221
      $region62: #{kogpt2_chat_forward.5} parent=59 // pred_check_branch
        %746 = sbr.rel (%p744) target = $region64
      $region63: #{kogpt2_chat_forward.5} parent=59 // pred_region
        %p747 = scmp.lt.s32.totalorder %s20, 1
        %s748 = scalar_select %p747, %s20, 1
        %s749 = smul.addr %s748, 8
        %s750 = scalar_lea.vmem %s8, %s749
      $region64: #{kogpt2_chat_forward.5} parent=59 // pred_fallthru
        _
    $region60: #{kogpt2_chat_forward.5} parent=5 // pred_fallthru
      _
  $region6: #{kogpt2_chat_forward.5} parent=0 // loop_footer
    %s18 = sadd.s32 1, %s14
  $region7: #{kogpt2_chat_forward.5} parent=0 // loop_footer_branch
    %13 = sbr.rel target = $region3
  $region8: #{kogpt2_chat_forward.5} parent=0 // loop_exit
    _

</llo_original>
